<compile_context>
chip_gen: v7x
topology: tpu7x:2x2x1
jax: 0.10.0
libtpu: 0.0.40
codegen_flags: <defaults>
</compile_context>

<pallas_src>
import functools

import jax
import jax.numpy as jnp
from jax import lax
from jax.experimental import pallas as pl
from jax.experimental.pallas import tpu as pltpu

NUM_CLASS = 22   # restypes_with_x_and_gap: 20 aa + 'X' + '-'
_MM_EPS = 1e-10  # masked_mean epsilon (see TODO above)


def _metric_kernel(coevo_ref, msa_ref, msa_mask_ref, labels_ref, cmask_ref,
                   mask_ref, prof_ref, out_ref,
                   pred_acc, s_correct, s_w, s_errw, *, sub_rows):
    """Grid = (batch, residue_tiles, msa_depth_tiles); MSA depth is the reduction.

    Per step (residues N are the lane axis everywhere):
      coevo_ref    : (tm, C, tn)  bf16/f32 coevolution logits
      msa_ref      : (tm, tn)     int32
      msa_mask_ref : (tm, tn)     f32
      labels_ref   : (C, tn)      sequence profile
      cmask_ref    : (C, 1)       class mask ('-' zeroed)
      mask_ref     : (1, tn)      residue mask
      prof_ref     : (C, tn)      profile head logits
      out_ref      : (1, 8)       packed per-(batch, residue-tile) partial sums
    """
    mt = pl.program_id(2)
    n_mt = pl.num_programs(2)

    @pl.when(mt == 0)
    def _init():
        pred_acc[...] = jnp.zeros_like(pred_acc)
        s_correct[...] = jnp.zeros_like(s_correct)
        s_w[...] = jnp.zeros_like(s_w)
        s_errw[...] = jnp.zeros_like(s_errw)

    tm = coevo_ref.shape[0]
    n_sub = tm // sub_rows
    cm_col = cmask_ref[...]                                     # (C, 1), hoisted
    cls_col = lax.broadcasted_iota(jnp.int32, (cm_col.shape[0], 1), 0)  # (C, 1)

    # Walk the big bf16 DMA block in small row sub-chunks so the f32 temporaries
    # (x / ex / prob / selects) stay a few vregs deep while tm stays large.
    @pl.loop(0, n_sub)
    def _chunk(s):
        r0 = pl.multiple_of(s * sub_rows, sub_rows)
        x = coevo_ref[pl.ds(r0, sub_rows), :, :].astype(jnp.float32)   # (sub, C, tn)
        msa_c = msa_ref[pl.ds(r0, sub_rows), :]                        # (sub, tn) i32
        mmask_c = msa_mask_ref[pl.ds(r0, sub_rows), :]                 # (sub, tn) f32

        # ---- class softmax (sublane reduce over C) + MSA-depth accumulation
        x_max = jnp.max(x, axis=1, keepdims=True)                      # (sub, 1, tn)
        ex = jnp.exp(x - x_max)
        inv = pl.reciprocal(jnp.sum(ex, axis=1, keepdims=True), approx=True)
        prob = ex * inv
        pred_acc[...] += jnp.sum(prob, axis=0)                         # (C, tn)

        # ---- identity / perplexity statistics (fused one-hot gathers)
        oh = cls_col == msa_c[:, None, :]                              # bool (sub, C, tn)
        # w = class_mask[msa] * msa_mask
        w = jnp.sum(jnp.where(oh, cm_col[None], 0.0), axis=1) * mmask_c
        ex_at = jnp.sum(jnp.where(oh, ex, 0.0), axis=1)                # exp(x[msa]-xmax)
        # argmax(prob) == msa  <=>  exp(x[msa]-xmax) >= max(exp(x-xmax)) == 1
        correct = (ex_at >= 1.0).astype(jnp.float32)
        prob_at = ex_at * inv[:, 0, :]                                 # prob[..., msa]
        err = -w * jnp.log(prob_at + 1e-7)                             # -sum_c mask4*log(prob+1e-7)
        s_correct[...] += jnp.sum(correct * w, keepdims=True)
        s_w[...] += jnp.sum(w, keepdims=True)
        s_errw[...] += jnp.sum(err * w, keepdims=True)

    # ---- epilogue: cosine metrics + packed writeback on the last MSA tile only
    @pl.when(mt == n_mt - 1)
    def _fin():
        labels = labels_ref[...]                                       # (C, tn)
        res_mask = mask_ref[...]                                       # (1, tn)

        def cos_sim(a, b):                                             # reduce over classes
            dot = jnp.sum(a * b, axis=0, keepdims=True)
            na = jnp.sqrt(jnp.sum(a * a, axis=0, keepdims=True))
            nb = jnp.sqrt(jnp.sum(b * b, axis=0, keepdims=True))
            return dot / (jnp.maximum(na, 1e-8) * jnp.maximum(nb, 1e-8))

        lab_m = labels * cm_col

        # coevolution cosine: renormalised MSA-averaged prediction (exact divides
        # here are once-per-tile, negligible cost)
        pred = pred_acc[...]
        pred = pred / (jnp.sum(pred, axis=0, keepdims=True) + 1e-6)
        sim_co = cos_sim(pred * cm_col, lab_m)                         # (1, tn)

        # profile cosine: softmax(profile logits)
        pz = prof_ref[...]
        pe = jnp.exp(pz - jnp.max(pz, axis=0, keepdims=True))
        pp = pe / jnp.sum(pe, axis=0, keepdims=True)
        sim_pr = cos_sim(pp * cm_col, lab_m)                           # (1, tn)

        out_ref[...] = jnp.concatenate([
            jnp.sum(sim_pr * res_mask, keepdims=True),   # profile cosine numerator
            jnp.sum(sim_co * res_mask, keepdims=True),   # coevolution cosine numerator
            jnp.sum(res_mask, keepdims=True),            # residue mask sum
            s_correct[...],                              # identity numerator
            s_w[...],                                    # sum(mask4) weight
            s_errw[...],                                 # perplexity numerator
            jnp.zeros((1, 2), jnp.float32),              # pad to 8 lanes
        ], axis=1)


def _tile(total, block, align):
    """Largest usable tile: the requested block if it divides `total` and meets the
    lane/sublane alignment, else fall back to the full extent."""
    if block < total and total % block == 0 and block % align == 0:
        return block
    return total


def metric_dict_head_forward(headers, batch, *, msa_block=128, res_block=512):
    """Pallas implementation of MetricDictHead.forward (profile/coevolution metrics).
    Returns dict(loss=metrics) like the torch module."""
    coevo_logits = headers['coevolution']['logits']                    # (B, M, N, C), bf16 ok
    prof_logits = headers['profile']['logits'].astype(jnp.float32)     # (B, N, C)
    labels = batch['sequence_profile'].astype(jnp.float32)             # (B, N, C)
    class_mask = batch['sequence_profile_mask'].astype(jnp.float32)    # (C,)
    mask = batch['mask'].astype(jnp.float32)                           # (B, N)
    msa = batch['msa'].astype(jnp.int32)                               # (B, M, N)
    msa_mask = batch['msa_mask'].astype(jnp.float32)                   # (B, M, N)

    B, M, N, C = coevo_logits.shape
    tm = _tile(M, msa_block, 8)       # MSA rows per block (sublane-aligned)
    tn = _tile(N, res_block, 128)     # residues per block (lane-aligned)
    n_mt = M // tm
    n_nt = N // tn
    sub = 8 if tm % 8 == 0 else tm    # in-kernel sub-chunk rows

    # One wrapper-side relayout so residues (N) sit on the lane axis; all class
    # reductions in the kernel become 22-sublane reduces on full 128-lane vregs.
    coevo_t = jnp.transpose(coevo_logits, (0, 1, 3, 2))                # (B, M, C, N)
    labels_t = jnp.transpose(labels, (0, 2, 1))                        # (B, C, N)
    prof_t = jnp.transpose(prof_logits, (0, 2, 1))                     # (B, C, N)
    cmask = class_mask.reshape(1, C, 1)                                # (1, C, 1)
    mask3 = mask[:, None, :]                                           # (B, 1, N)

    out = pl.pallas_call(
        functools.partial(_metric_kernel, sub_rows=sub),
        grid=(B, n_nt, n_mt),
        in_specs=[
            pl.BlockSpec((None, tm, C, tn), lambda b, nt, mt: (b, mt, 0, nt)),  # coevo logits
            pl.BlockSpec((None, tm, tn), lambda b, nt, mt: (b, mt, nt)),        # msa
            pl.BlockSpec((None, tm, tn), lambda b, nt, mt: (b, mt, nt)),        # msa mask
            pl.BlockSpec((None, C, tn), lambda b, nt, mt: (b, 0, nt)),          # sequence profile
            pl.BlockSpec((None, C, 1), lambda b, nt, mt: (0, 0, 0)),            # class mask
            pl.BlockSpec((None, 1, tn), lambda b, nt, mt: (b, 0, nt)),          # residue mask
            pl.BlockSpec((None, C, tn), lambda b, nt, mt: (b, 0, nt)),          # profile logits
        ],
        out_specs=pl.BlockSpec((None, None, 1, 8), lambda b, nt, mt: (b, nt, 0, 0)),
        out_shape=jax.ShapeDtypeStruct((B, n_nt, 1, 8), jnp.float32),
        scratch_shapes=[
            pltpu.VMEM((C, tn), jnp.float32),   # pred accumulator (sum over MSA depth)
            pltpu.VMEM((1, 1), jnp.float32),    # identity numerator
            pltpu.VMEM((1, 1), jnp.float32),    # mask4 weight sum
            pltpu.VMEM((1, 1), jnp.float32),    # perplexity numerator
        ],
        compiler_params=pltpu.CompilerParams(
            dimension_semantics=("parallel", "parallel", "arbitrary"),
            vmem_limit_bytes=48 * 1024 * 1024),
    )(coevo_t, msa, msa_mask, labels_t, cmask, mask3, prof_t)

    totals = jnp.sum(out, axis=(0, 1, 2))                              # (8,)
    msum = totals[2] + _MM_EPS
    wsum = totals[4] + _MM_EPS
    metrics = {
        'profile': {'cosine': totals[0] / msum},
        'coevolution': {
            'cosine': totals[1] / msum,
            'identity': totals[3] / wsum,
            'perplexity': jnp.exp(totals[5] / wsum),
        },
    }
    return {'loss': metrics}


def reference_forward(headers, batch):
    """Pure-JAX transcription of the torch MetricDictHead profile/coevolution path."""
    def masked_mean(value, mask):
        return jnp.sum(value * mask) / (jnp.sum(mask) + _MM_EPS)

    def cos_sim(a, b):
        dot = jnp.sum(a * b, axis=-1)
        na = jnp.sqrt(jnp.sum(a * a, axis=-1))
        nb = jnp.sqrt(jnp.sum(b * b, axis=-1))
        return dot / (jnp.maximum(na, 1e-8) * jnp.maximum(nb, 1e-8))

    labels = batch['sequence_profile'].astype(jnp.float32)
    cm = batch['sequence_profile_mask'].astype(jnp.float32).reshape(1, 1, -1)
    mask = batch['mask'].astype(jnp.float32)

    # profile.cosine
    p = jax.nn.softmax(headers['profile']['logits'].astype(jnp.float32), axis=-1)
    prof_cos = masked_mean(cos_sim(p * cm, labels * cm), mask)

    # coevolution
    prob = jax.nn.softmax(headers['coevolution']['logits'].astype(jnp.float32), axis=-1)
    pred = jnp.sum(prob, axis=-3)
    pred = pred / (jnp.sum(pred, axis=-1, keepdims=True) + 1e-6)
    coevo_cos = masked_mean(cos_sim(pred * cm, labels * cm), mask)

    C = prob.shape[-1]
    oh_msa = jax.nn.one_hot(batch['msa'], C, dtype=jnp.float32)
    mask4 = oh_msa * cm[None] * batch['msa_mask'].astype(jnp.float32)[..., None]
    w = jnp.sum(mask4, axis=-1)
    # identity: one_hot(argmax prob) dotted with mask4 (max-compare == argmax up to ties)
    prob_at = jnp.sum(oh_msa * prob, axis=-1)
    pred_match = (prob_at >= jnp.max(prob, axis=-1)).astype(jnp.float32)
    identity = jnp.sum(pred_match * w) / (jnp.sum(mask4) + _MM_EPS)
    # perplexity
    errors = -jnp.sum(mask4 * jnp.log(prob + 1e-7), axis=-1)
    perplexity = jnp.exp(masked_mean(errors, w))

    return {'loss': {'profile': {'cosine': prof_cos},
                     'coevolution': {'cosine': coevo_cos,
                                     'identity': identity,
                                     'perplexity': perplexity}}}


if __name__ == "__main__":
    B, M, N, C = 2, 32, 24, NUM_CLASS   # batch, msa depth, residues, classes

    key = jax.random.PRNGKey(0)
    ks = jax.random.split(key, 6)
    coevo_logits = jax.random.normal(ks[0], (B, M, N, C), dtype=jnp.float32).astype(jnp.bfloat16)
    prof_logits = jax.random.normal(ks[1], (B, N, C), dtype=jnp.float32)
    seq_profile = jax.random.uniform(ks[2], (B, N, C), dtype=jnp.float32)
    seq_profile = seq_profile / jnp.sum(seq_profile, axis=-1, keepdims=True)
    class_mask = jnp.ones((C,), jnp.float32).at[-1].set(0.0)   # mask the gap class '-'
    mask = (jax.random.uniform(ks[3], (B, N)) > 0.15).astype(jnp.float32)
    msa = jax.random.randint(ks[4], (B, M, N), 0, C, dtype=jnp.int32)
    msa_mask = (jax.random.uniform(ks[5], (B, M, N)) > 0.1).astype(jnp.float32)

    headers = {'profile': {'logits': prof_logits},
               'coevolution': {'logits': coevo_logits}}
    batch = {'sequence_profile': seq_profile,
             'sequence_profile_mask': class_mask,
             'mask': mask, 'msa': msa, 'msa_mask': msa_mask}

    # msa_block=16 → 2 MSA grid steps of 16 rows, 2 in-kernel sub-chunks each.
    out = metric_dict_head_forward(headers, batch, msa_block=16)
    out = jax.block_until_ready(out)
    ref = reference_forward(headers, batch)

    def flatten(d):
        return {
            'profile.cosine': d['loss']['profile']['cosine'],
            'coevolution.cosine': d['loss']['coevolution']['cosine'],
            'coevolution.identity': d['loss']['coevolution']['identity'],
            'coevolution.perplexity': d['loss']['coevolution']['perplexity'],
        }

    fo, fr = flatten(out), flatten(ref)
    for k in fo:
        a, b = float(fo[k]), float(fr[k])
        # 2e-3 relative: pl.reciprocal(approx=True) in the in-kernel coevolution
        # softmax adds ~2^-12 relative error vs the exact-division reference.
        assert abs(a - b) <= 1e-4 + 2e-3 * abs(b), (k, a, b)

    print("KERNEL_OK")
</pallas_src>

<mosaic_0001>
module attributes {stable_mosaic.version = 11 : i64} {
  func.func @_metric_kernel(%arg0: i32, %arg1: i32, %arg2: i32, %arg3: memref<1x16x22x24xbf16, #tpu.memory_space<vmem>>, %arg4: memref<1x16x24xi32, #tpu.memory_space<vmem>>, %arg5: memref<1x16x24xf32, #tpu.memory_space<vmem>>, %arg6: memref<1x22x24xf32, #tpu.memory_space<vmem>>, %arg7: memref<1x22x1xf32, #tpu.memory_space<vmem>>, %arg8: memref<1x1x24xf32, #tpu.memory_space<vmem>>, %arg9: memref<1x22x24xf32, #tpu.memory_space<vmem>>, %arg10: memref<1x1x1x8xf32, #tpu.memory_space<vmem>>, %arg11: memref<22x24xf32, #tpu.memory_space<vmem>>, %arg12: memref<1x1xf32, #tpu.memory_space<vmem>>, %arg13: memref<1x1xf32, #tpu.memory_space<vmem>>, %arg14: memref<1x1xf32, #tpu.memory_space<vmem>>) attributes {dimension_semantics = [#tpu.dimension_semantics<parallel>, #tpu.dimension_semantics<parallel>, #tpu.dimension_semantics<arbitrary>], iteration_bounds = array<i64: 2, 1, 2>, scalar_prefetch = 0 : i64, scratch_operands = 4 : i64, tpu.core_type = #tpu.core_type<tc>, window_params = [{transform_indices = @transform_0, window_bounds = array<i64: 1, 16, 22, 24>}, {transform_indices = @transform_1, window_bounds = array<i64: 1, 16, 24>}, {transform_indices = @transform_2, window_bounds = array<i64: 1, 16, 24>}, {transform_indices = @transform_3, window_bounds = array<i64: 1, 22, 24>}, {pipeline_mode = #tpu.pipeline_mode<synchronous>, transform_indices = @transform_4, window_bounds = array<i64: 1, 22, 1>}, {transform_indices = @transform_5, window_bounds = array<i64: 1, 1, 24>}, {transform_indices = @transform_6, window_bounds = array<i64: 1, 22, 24>}, {transform_indices = @transform_7, window_bounds = array<i64: 1, 1, 1, 8>}]} {
    %c0_i32 = arith.constant 0 : i32
    %0 = arith.cmpi eq, %arg2, %c0_i32 : i32
    %1 = arith.extui %0 : i1 to i32
    %c0_i32_0 = arith.constant 0 : i32
    %2 = arith.cmpi ne, %1, %c0_i32_0 : i32
    scf.if %2 {
      %cst = arith.constant 0.000000e+00 : f32
      %10 = vector.broadcast %cst : f32 to vector<22x24xf32>
      %c0_7 = arith.constant 0 : index
      %c0_8 = arith.constant 0 : index
      %11 = vector.load %arg11[%c0_7, %c0_8] : memref<22x24xf32, #tpu.memory_space<vmem>>, vector<22x24xf32>
      tpu.vector_store %arg11[%c0_7, %c0_8], %10 {strides = array<i32>} : memref<22x24xf32, #tpu.memory_space<vmem>>, vector<22x24xf32>,
      %cst_9 = arith.constant 0.000000e+00 : f32
      %12 = vector.broadcast %cst_9 : f32 to vector<1x1xf32>
      %c0_10 = arith.constant 0 : index
      %c0_11 = arith.constant 0 : index
      %13 = vector.load %arg12[%c0_10, %c0_11] : memref<1x1xf32, #tpu.memory_space<vmem>>, vector<1x1xf32>
      tpu.vector_store %arg12[%c0_10, %c0_11], %12 {strides = array<i32>} : memref<1x1xf32, #tpu.memory_space<vmem>>, vector<1x1xf32>,
      %cst_12 = arith.constant 0.000000e+00 : f32
      %14 = vector.broadcast %cst_12 : f32 to vector<1x1xf32>
      %c0_13 = arith.constant 0 : index
      %c0_14 = arith.constant 0 : index
      %15 = vector.load %arg13[%c0_13, %c0_14] : memref<1x1xf32, #tpu.memory_space<vmem>>, vector<1x1xf32>
      tpu.vector_store %arg13[%c0_13, %c0_14], %14 {strides = array<i32>} : memref<1x1xf32, #tpu.memory_space<vmem>>, vector<1x1xf32>,
      %cst_15 = arith.constant 0.000000e+00 : f32
      %16 = vector.broadcast %cst_15 : f32 to vector<1x1xf32>
      %c0_16 = arith.constant 0 : index
      %c0_17 = arith.constant 0 : index
      %17 = vector.load %arg14[%c0_16, %c0_17] : memref<1x1xf32, #tpu.memory_space<vmem>>, vector<1x1xf32>
      tpu.vector_store %arg14[%c0_16, %c0_17], %16 {strides = array<i32>} : memref<1x1xf32, #tpu.memory_space<vmem>>, vector<1x1xf32>,
    } else {
    }
    %c0 = arith.constant 0 : index
    %c0_1 = arith.constant 0 : index
    %c0_2 = arith.constant 0 : index
    %3 = vector.load %arg7[%c0, %c0_1, %c0_2] : memref<1x22x1xf32, #tpu.memory_space<vmem>>, vector<1x22x1xf32>
    %4 = vector.shape_cast %3 : vector<1x22x1xf32> to vector<22x1xf32>
    %5 = tpu.iota {dimensions = array<i32: 0>} : vector<22x1xi32>
    %c0_i32_3 = arith.constant 0 : i32
    %c2_i32 = arith.constant 2 : i32
    %6 = arith.addi %c0_i32_3, %c2_i32 : i32
    %c1_i32 = arith.constant 1 : i32
    scf.for %arg15 = %c0_i32_3 to %6 step %c1_i32  : i32 {
      %c1_i32_7 = arith.constant 1 : i32
      %10 = arith.muli %arg15, %c1_i32_7 : i32
      %c0_i32_8 = arith.constant 0 : i32
      %11 = arith.addi %c0_i32_8, %10 : i32
      %c8_i32 = arith.constant 8 : i32
      %12 = arith.muli %11, %c8_i32 : i32
      %13 = tpu.assume_multiple %12, 8 : i32
      %c0_9 = arith.constant 0 : index
      %14 = arith.index_cast %13 : i32 to index
      %c0_10 = arith.constant 0 : index
      %c0_11 = arith.constant 0 : index
      %15 = vector.load %arg3[%c0_9, %14, %c0_10, %c0_11] : memref<1x16x22x24xbf16, #tpu.memory_space<vmem>>, vector<1x8x22x24xbf16>
      %16 = vector.shape_cast %15 : vector<1x8x22x24xbf16> to vector<8x22x24xbf16>
      %17 = arith.extf %16 : vector<8x22x24xbf16> to vector<8x22x24xf32>
      %c0_12 = arith.constant 0 : index
      %18 = arith.index_cast %13 : i32 to index
      %c0_13 = arith.constant 0 : index
      %19 = vector.load %arg4[%c0_12, %18, %c0_13] : memref<1x16x24xi32, #tpu.memory_space<vmem>>, vector<1x8x24xi32>
      %20 = vector.shape_cast %19 : vector<1x8x24xi32> to vector<8x24xi32>
      %c0_14 = arith.constant 0 : index
      %21 = arith.index_cast %13 : i32 to index
      %c0_15 = arith.constant 0 : index
      %22 = vector.load %arg5[%c0_14, %21, %c0_15] : memref<1x16x24xf32, #tpu.memory_space<vmem>>, vector<1x8x24xf32>
      %23 = vector.shape_cast %22 : vector<1x8x24xf32> to vector<8x24xf32>
      %cst = arith.constant dense<0xFF800000> : vector<8x24xf32>
      %24 = vector.multi_reduction <maximumf>, %17, %cst [1] : vector<8x22x24xf32> to vector<8x24xf32>
      %25 = vector.shape_cast %24 : vector<8x24xf32> to vector<8x1x24xf32>
      %26 = vector.broadcast %25 : vector<8x1x24xf32> to vector<8x22x24xf32>
      %27 = arith.subf %17, %26 : vector<8x22x24xf32>
      %28 = math.exp %27 : vector<8x22x24xf32>
      %cst_16 = arith.constant dense<0.000000e+00> : vector<8x24xf32>
      %29 = vector.multi_reduction <add>, %28, %cst_16 [1] : vector<8x22x24xf32> to vector<8x24xf32>
      %30 = vector.shape_cast %29 : vector<8x24xf32> to vector<8x1x24xf32>
      %31 = tpu.reciprocal %30 {approx = true} : vector<8x1x24xf32> -> vector<8x1x24xf32>
      %32 = vector.broadcast %31 : vector<8x1x24xf32> to vector<8x22x24xf32>
      %33 = arith.mulf %28, %32 : vector<8x22x24xf32>
      %c0_17 = arith.constant 0 : index
      %c0_18 = arith.constant 0 : index
      %34 = vector.load %arg11[%c0_17, %c0_18] : memref<22x24xf32, #tpu.memory_space<vmem>>, vector<22x24xf32>
      %cst_19 = arith.constant dense<0.000000e+00> : vector<22x24xf32>
      %35 = vector.multi_reduction <add>, %33, %cst_19 [0] : vector<8x22x24xf32> to vector<22x24xf32>
      %36 = arith.addf %34, %35 : vector<22x24xf32>
      %c0_20 = arith.constant 0 : index
      %c0_21 = arith.constant 0 : index
      %37 = vector.load %arg11[%c0_20, %c0_21] : memref<22x24xf32, #tpu.memory_space<vmem>>, vector<22x24xf32>
      tpu.vector_store %arg11[%c0_20, %c0_21], %36 {strides = array<i32>} : memref<22x24xf32, #tpu.memory_space<vmem>>, vector<22x24xf32>,
      %38 = vector.shape_cast %20 : vector<8x24xi32> to vector<8x1x24xi32>
      %39 = vector.shape_cast %5 : vector<22x1xi32> to vector<1x22x1xi32>
      %40 = vector.broadcast %39 : vector<1x22x1xi32> to vector<8x22x24xi32>
      %41 = vector.broadcast %38 : vector<8x1x24xi32> to vector<8x22x24xi32>
      %42 = arith.cmpi eq, %40, %41 : vector<8x22x24xi32>
      %43 = vector.shape_cast %4 : vector<22x1xf32> to vector<1x22x1xf32>
      %cst_22 = arith.constant 0.000000e+00 : f32
      %44 = vector.shape_cast %43 : vector<1x22x1xf32> to vector<1x22x1xf32>
      %45 = vector.broadcast %44 : vector<1x22x1xf32> to vector<8x22x24xf32>
      %46 = vector.broadcast %cst_22 : f32 to vector<8x22x24xf32>
      %47 = arith.select %42, %45, %46 : vector<8x22x24xi1>, vector<8x22x24xf32>
      %cst_23 = arith.constant dense<0.000000e+00> : vector<8x24xf32>
      %48 = vector.multi_reduction <add>, %47, %cst_23 [1] : vector<8x22x24xf32> to vector<8x24xf32>
      %49 = arith.mulf %48, %23 : vector<8x24xf32>
      %cst_24 = arith.constant 0.000000e+00 : f32
      %50 = vector.broadcast %cst_24 : f32 to vector<8x22x24xf32>
      %51 = arith.select %42, %28, %50 : vector<8x22x24xi1>, vector<8x22x24xf32>
      %cst_25 = arith.constant dense<0.000000e+00> : vector<8x24xf32>
      %52 = vector.multi_reduction <add>, %51, %cst_25 [1] : vector<8x22x24xf32> to vector<8x24xf32>
      %cst_26 = arith.constant 1.000000e+00 : f32
      %53 = vector.broadcast %cst_26 : f32 to vector<8x24xf32>
      %54 = arith.cmpf oge, %52, %53 : vector<8x24xf32>
      %55 = arith.extui %54 : vector<8x24xi1> to vector<8x24xi32>
      %56 = arith.sitofp %55 : vector<8x24xi32> to vector<8x24xf32>
      %57 = vector.shape_cast %31 : vector<8x1x24xf32> to vector<8x24xf32>
      %58 = arith.mulf %52, %57 : vector<8x24xf32>
      %cst_27 = arith.constant 0.000000e+00 : f32
      %59 = vector.broadcast %cst_27 : f32 to vector<8x24xf32>
      %60 = arith.subf %59, %49 : vector<8x24xf32>
      %cst_28 = arith.constant 1.000000e-07 : f32
      %61 = vector.broadcast %cst_28 : f32 to vector<8x24xf32>
      %62 = arith.addf %58, %61 : vector<8x24xf32>
      %63 = math.log %62 : vector<8x24xf32>
      %64 = arith.mulf %60, %63 : vector<8x24xf32>
      %c0_29 = arith.constant 0 : index
      %c0_30 = arith.constant 0 : index
      %65 = vector.load %arg12[%c0_29, %c0_30] : memref<1x1xf32, #tpu.memory_space<vmem>>, vector<1x1xf32>
      %66 = arith.mulf %56, %49 : vector<8x24xf32>
      %67 = vector.shape_cast %66 : vector<8x24xf32> to vector<1x8x24xf32>
      %cst_31 = arith.constant dense<0.000000e+00> : vector<1xf32>
      %68 = vector.multi_reduction <add>, %67, %cst_31 [1, 2] : vector<1x8x24xf32> to vector<1xf32>
      %69 = vector.shape_cast %68 : vector<1xf32> to vector<1x1x1xf32>
      %70 = vector.extract %69[0, 0, 0] : f32 from vector<1x1x1xf32>
      %71 = vector.broadcast %70 : f32 to vector<1x1xf32>
      %72 = arith.addf %65, %71 : vector<1x1xf32>
      %c0_32 = arith.constant 0 : index
      %c0_33 = arith.constant 0 : index
      %73 = vector.load %arg12[%c0_32, %c0_33] : memref<1x1xf32, #tpu.memory_space<vmem>>, vector<1x1xf32>
      tpu.vector_store %arg12[%c0_32, %c0_33], %72 {strides = array<i32>} : memref<1x1xf32, #tpu.memory_space<vmem>>, vector<1x1xf32>,
      %c0_34 = arith.constant 0 : index
      %c0_35 = arith.constant 0 : index
      %74 = vector.load %arg13[%c0_34, %c0_35] : memref<1x1xf32, #tpu.memory_space<vmem>>, vector<1x1xf32>
      %75 = vector.shape_cast %49 : vector<8x24xf32> to vector<1x8x24xf32>
      %cst_36 = arith.constant dense<0.000000e+00> : vector<1xf32>
      %76 = vector.multi_reduction <add>, %75, %cst_36 [1, 2] : vector<1x8x24xf32> to vector<1xf32>
      %77 = vector.shape_cast %76 : vector<1xf32> to vector<1x1x1xf32>
      %78 = vector.extract %77[0, 0, 0] : f32 from vector<1x1x1xf32>
      %79 = vector.broadcast %78 : f32 to vector<1x1xf32>
      %80 = arith.addf %74, %79 : vector<1x1xf32>
      %c0_37 = arith.constant 0 : index
      %c0_38 = arith.constant 0 : index
      %81 = vector.load %arg13[%c0_37, %c0_38] : memref<1x1xf32, #tpu.memory_space<vmem>>, vector<1x1xf32>
      tpu.vector_store %arg13[%c0_37, %c0_38], %80 {strides = array<i32>} : memref<1x1xf32, #tpu.memory_space<vmem>>, vector<1x1xf32>,
      %c0_39 = arith.constant 0 : index
      %c0_40 = arith.constant 0 : index
      %82 = vector.load %arg14[%c0_39, %c0_40] : memref<1x1xf32, #tpu.memory_space<vmem>>, vector<1x1xf32>
      %83 = arith.mulf %64, %49 : vector<8x24xf32>
      %84 = vector.shape_cast %83 : vector<8x24xf32> to vector<1x8x24xf32>
      %cst_41 = arith.constant dense<0.000000e+00> : vector<1xf32>
      %85 = vector.multi_reduction <add>, %84, %cst_41 [1, 2] : vector<1x8x24xf32> to vector<1xf32>
      %86 = vector.shape_cast %85 : vector<1xf32> to vector<1x1x1xf32>
      %87 = vector.extract %86[0, 0, 0] : f32 from vector<1x1x1xf32>
      %88 = vector.broadcast %87 : f32 to vector<1x1xf32>
      %89 = arith.addf %82, %88 : vector<1x1xf32>
      %c0_42 = arith.constant 0 : index
      %c0_43 = arith.constant 0 : index
      %90 = vector.load %arg14[%c0_42, %c0_43] : memref<1x1xf32, #tpu.memory_space<vmem>>, vector<1x1xf32>
      tpu.vector_store %arg14[%c0_42, %c0_43], %89 {strides = array<i32>} : memref<1x1xf32, #tpu.memory_space<vmem>>, vector<1x1xf32>,
    }
    %c2_i32_4 = arith.constant 2 : i32
    %c1_i32_5 = arith.constant 1 : i32
    %7 = arith.cmpi eq, %arg2, %c1_i32_5 : i32
    %8 = arith.extui %7 : i1 to i32
    %c0_i32_6 = arith.constant 0 : i32
    %9 = arith.cmpi ne, %8, %c0_i32_6 : i32
    scf.if %9 {
      %c0_7 = arith.constant 0 : index
      %c0_8 = arith.constant 0 : index
      %c0_9 = arith.constant 0 : index
      %10 = vector.load %arg6[%c0_7, %c0_8, %c0_9] : memref<1x22x24xf32, #tpu.memory_space<vmem>>, vector<1x22x24xf32>
      %11 = vector.shape_cast %10 : vector<1x22x24xf32> to vector<22x24xf32>
      %c0_10 = arith.constant 0 : index
      %c0_11 = arith.constant 0 : index
      %c0_12 = arith.constant 0 : index
      %12 = vector.load %arg8[%c0_10, %c0_11, %c0_12] : memref<1x1x24xf32, #tpu.memory_space<vmem>>, vector<1x1x24xf32>
      %13 = vector.shape_cast %12 : vector<1x1x24xf32> to vector<1x24xf32>
      %14 = vector.broadcast %4 : vector<22x1xf32> to vector<22x24xf32>
      %15 = arith.mulf %11, %14 : vector<22x24xf32>
      %c0_13 = arith.constant 0 : index
      %c0_14 = arith.constant 0 : index
      %16 = vector.load %arg11[%c0_13, %c0_14] : memref<22x24xf32, #tpu.memory_space<vmem>>, vector<22x24xf32>
      %cst = arith.constant dense<0.000000e+00> : vector<24xf32>
      %17 = vector.multi_reduction <add>, %16, %cst [0] : vector<22x24xf32> to vector<24xf32>
      %18 = vector.shape_cast %17 : vector<24xf32> to vector<1x24xf32>
      %cst_15 = arith.constant 9.99999997E-7 : f32
      %19 = vector.broadcast %cst_15 : f32 to vector<1x24xf32>
      %20 = arith.addf %18, %19 : vector<1x24xf32>
      %21 = vector.broadcast %20 : vector<1x24xf32> to vector<22x24xf32>
      %22 = arith.divf %16, %21 : vector<22x24xf32>
      %23 = vector.broadcast %4 : vector<22x1xf32> to vector<22x24xf32>
      %24 = arith.mulf %22, %23 : vector<22x24xf32>
      %25 = arith.mulf %24, %15 : vector<22x24xf32>
      %cst_16 = arith.constant dense<0.000000e+00> : vector<24xf32>
      %26 = vector.multi_reduction <add>, %25, %cst_16 [0] : vector<22x24xf32> to vector<24xf32>
      %27 = vector.shape_cast %26 : vector<24xf32> to vector<1x24xf32>
      %28 = arith.mulf %24, %24 : vector<22x24xf32>
      %cst_17 = arith.constant dense<0.000000e+00> : vector<24xf32>
      %29 = vector.multi_reduction <add>, %28, %cst_17 [0] : vector<22x24xf32> to vector<24xf32>
      %30 = vector.shape_cast %29 : vector<24xf32> to vector<1x24xf32>
      %31 = math.sqrt %30 : vector<1x24xf32>
      %32 = arith.mulf %15, %15 : vector<22x24xf32>
      %cst_18 = arith.constant dense<0.000000e+00> : vector<24xf32>
      %33 = vector.multi_reduction <add>, %32, %cst_18 [0] : vector<22x24xf32> to vector<24xf32>
      %34 = vector.shape_cast %33 : vector<24xf32> to vector<1x24xf32>
      %35 = math.sqrt %34 : vector<1x24xf32>
      %cst_19 = arith.constant 9.99999993E-9 : f32
      %36 = vector.broadcast %cst_19 : f32 to vector<1x24xf32>
      %37 = arith.maximumf %31, %36 : vector<1x24xf32>
      %cst_20 = arith.constant 9.99999993E-9 : f32
      %38 = vector.broadcast %cst_20 : f32 to vector<1x24xf32>
      %39 = arith.maximumf %35, %38 : vector<1x24xf32>
      %40 = arith.mulf %37, %39 : vector<1x24xf32>
      %41 = arith.divf %27, %40 : vector<1x24xf32>
      %c0_21 = arith.constant 0 : index
      %c0_22 = arith.constant 0 : index
      %c0_23 = arith.constant 0 : index
      %42 = vector.load %arg9[%c0_21, %c0_22, %c0_23] : memref<1x22x24xf32, #tpu.memory_space<vmem>>, vector<1x22x24xf32>
      %43 = vector.shape_cast %42 : vector<1x22x24xf32> to vector<22x24xf32>
      %cst_24 = arith.constant dense<0xFF800000> : vector<24xf32>
      %44 = vector.multi_reduction <maximumf>, %43, %cst_24 [0] : vector<22x24xf32> to vector<24xf32>
      %45 = vector.shape_cast %44 : vector<24xf32> to vector<1x24xf32>
      %46 = vector.broadcast %45 : vector<1x24xf32> to vector<22x24xf32>
      %47 = arith.subf %43, %46 : vector<22x24xf32>
      %48 = math.exp %47 : vector<22x24xf32>
      %cst_25 = arith.constant dense<0.000000e+00> : vector<24xf32>
      %49 = vector.multi_reduction <add>, %48, %cst_25 [0] : vector<22x24xf32> to vector<24xf32>
      %50 = vector.shape_cast %49 : vector<24xf32> to vector<1x24xf32>
      %51 = vector.broadcast %50 : vector<1x24xf32> to vector<22x24xf32>
      %52 = arith.divf %48, %51 : vector<22x24xf32>
      %53 = vector.broadcast %4 : vector<22x1xf32> to vector<22x24xf32>
      %54 = arith.mulf %52, %53 : vector<22x24xf32>
      %55 = arith.mulf %54, %15 : vector<22x24xf32>
      %cst_26 = arith.constant dense<0.000000e+00> : vector<24xf32>
      %56 = vector.multi_reduction <add>, %55, %cst_26 [0] : vector<22x24xf32> to vector<24xf32>
      %57 = vector.shape_cast %56 : vector<24xf32> to vector<1x24xf32>
      %58 = arith.mulf %54, %54 : vector<22x24xf32>
      %cst_27 = arith.constant dense<0.000000e+00> : vector<24xf32>
      %59 = vector.multi_reduction <add>, %58, %cst_27 [0] : vector<22x24xf32> to vector<24xf32>
      %60 = vector.shape_cast %59 : vector<24xf32> to vector<1x24xf32>
      %61 = math.sqrt %60 : vector<1x24xf32>
      %62 = arith.mulf %15, %15 : vector<22x24xf32>
      %cst_28 = arith.constant dense<0.000000e+00> : vector<24xf32>
      %63 = vector.multi_reduction <add>, %62, %cst_28 [0] : vector<22x24xf32> to vector<24xf32>
      %64 = vector.shape_cast %63 : vector<24xf32> to vector<1x24xf32>
      %65 = math.sqrt %64 : vector<1x24xf32>
      %cst_29 = arith.constant 9.99999993E-9 : f32
      %66 = vector.broadcast %cst_29 : f32 to vector<1x24xf32>
      %67 = arith.maximumf %61, %66 : vector<1x24xf32>
      %cst_30 = arith.constant 9.99999993E-9 : f32
      %68 = vector.broadcast %cst_30 : f32 to vector<1x24xf32>
      %69 = arith.maximumf %65, %68 : vector<1x24xf32>
      %70 = arith.mulf %67, %69 : vector<1x24xf32>
      %71 = arith.divf %57, %70 : vector<1x24xf32>
      %72 = arith.mulf %71, %13 : vector<1x24xf32>
      %73 = vector.shape_cast %72 : vector<1x24xf32> to vector<1x1x24xf32>
      %cst_31 = arith.constant dense<0.000000e+00> : vector<1xf32>
      %74 = vector.multi_reduction <add>, %73, %cst_31 [1, 2] : vector<1x1x24xf32> to vector<1xf32>
      %75 = vector.shape_cast %74 : vector<1xf32> to vector<1x1x1xf32>
      %76 = vector.extract %75[0, 0, 0] : f32 from vector<1x1x1xf32>
      %77 = vector.broadcast %76 : f32 to vector<1x1xf32>
      %78 = arith.mulf %41, %13 : vector<1x24xf32>
      %79 = vector.shape_cast %78 : vector<1x24xf32> to vector<1x1x24xf32>
      %cst_32 = arith.constant dense<0.000000e+00> : vector<1xf32>
      %80 = vector.multi_reduction <add>, %79, %cst_32 [1, 2] : vector<1x1x24xf32> to vector<1xf32>
      %81 = vector.shape_cast %80 : vector<1xf32> to vector<1x1x1xf32>
      %82 = vector.extract %81[0, 0, 0] : f32 from vector<1x1x1xf32>
      %83 = vector.broadcast %82 : f32 to vector<1x1xf32>
      %84 = vector.shape_cast %13 : vector<1x24xf32> to vector<1x1x24xf32>
      %cst_33 = arith.constant dense<0.000000e+00> : vector<1xf32>
      %85 = vector.multi_reduction <add>, %84, %cst_33 [1, 2] : vector<1x1x24xf32> to vector<1xf32>
      %86 = vector.shape_cast %85 : vector<1xf32> to vector<1x1x1xf32>
      %87 = vector.extract %86[0, 0, 0] : f32 from vector<1x1x1xf32>
      %88 = vector.broadcast %87 : f32 to vector<1x1xf32>
      %c0_34 = arith.constant 0 : index
      %c0_35 = arith.constant 0 : index
      %89 = vector.load %arg12[%c0_34, %c0_35] : memref<1x1xf32, #tpu.memory_space<vmem>>, vector<1x1xf32>
      %c0_36 = arith.constant 0 : index
      %c0_37 = arith.constant 0 : index
      %90 = vector.load %arg13[%c0_36, %c0_37] : memref<1x1xf32, #tpu.memory_space<vmem>>, vector<1x1xf32>
      %c0_38 = arith.constant 0 : index
      %c0_39 = arith.constant 0 : index
      %91 = vector.load %arg14[%c0_38, %c0_39] : memref<1x1xf32, #tpu.memory_space<vmem>>, vector<1x1xf32>
      %cst_40 = arith.constant 0.000000e+00 : f32
      %92 = vector.broadcast %cst_40 : f32 to vector<1x2xf32>
      %93 = tpu.concatenate %77, %83, %88, %89, %90, %91, %92 in 1 : vector<1x1xf32>, vector<1x1xf32>, vector<1x1xf32>, vector<1x1xf32>, vector<1x1xf32>, vector<1x1xf32>, vector<1x2xf32> -> vector<1x8xf32>
      %c0_41 = arith.constant 0 : index
      %c0_42 = arith.constant 0 : index
      %c0_43 = arith.constant 0 : index
      %c0_44 = arith.constant 0 : index
      %94 = vector.load %arg10[%c0_41, %c0_42, %c0_43, %c0_44] : memref<1x1x1x8xf32, #tpu.memory_space<vmem>>, vector<1x1x1x8xf32>
      %95 = vector.shape_cast %94 : vector<1x1x1x8xf32> to vector<1x8xf32>
      %96 = vector.shape_cast %93 : vector<1x8xf32> to vector<1x1x1x8xf32>
      tpu.vector_store %arg10[%c0_41, %c0_42, %c0_43, %c0_44], %96 {strides = array<i32>} : memref<1x1x1x8xf32, #tpu.memory_space<vmem>>, vector<1x1x1x8xf32>,
    } else {
    }
    return
  }
  func.func @transform_0(%arg0: i32, %arg1: i32, %arg2: i32) -> (i32, i32, i32, i32) {
    %c0_i32 = arith.constant 0 : i32
    %c0_i32_0 = arith.constant 0 : i32
    return %arg0, %arg2, %c0_i32, %arg1 : i32, i32, i32, i32
  }
  func.func @transform_1(%arg0: i32, %arg1: i32, %arg2: i32) -> (i32, i32, i32) {
    %c0_i32 = arith.constant 0 : i32
    return %arg0, %arg2, %arg1 : i32, i32, i32
  }
  func.func @transform_2(%arg0: i32, %arg1: i32, %arg2: i32) -> (i32, i32, i32) {
    %c0_i32 = arith.constant 0 : i32
    return %arg0, %arg2, %arg1 : i32, i32, i32
  }
  func.func @transform_3(%arg0: i32, %arg1: i32, %arg2: i32) -> (i32, i32, i32) {
    %c0_i32 = arith.constant 0 : i32
    %c0_i32_0 = arith.constant 0 : i32
    return %arg0, %c0_i32, %arg1 : i32, i32, i32
  }
  func.func @transform_4(%arg0: i32, %arg1: i32, %arg2: i32) -> (i32, i32, i32) {
    %c0_i32 = arith.constant 0 : i32
    %c0_i32_0 = arith.constant 0 : i32
    %c0_i32_1 = arith.constant 0 : i32
    %c0_i32_2 = arith.constant 0 : i32
    return %c0_i32, %c0_i32_0, %c0_i32_1 : i32, i32, i32
  }
  func.func @transform_5(%arg0: i32, %arg1: i32, %arg2: i32) -> (i32, i32, i32) {
    %c0_i32 = arith.constant 0 : i32
    %c0_i32_0 = arith.constant 0 : i32
    return %arg0, %c0_i32, %arg1 : i32, i32, i32
  }
  func.func @transform_6(%arg0: i32, %arg1: i32, %arg2: i32) -> (i32, i32, i32) {
    %c0_i32 = arith.constant 0 : i32
    %c0_i32_0 = arith.constant 0 : i32
    return %arg0, %c0_i32, %arg1 : i32, i32, i32
  }
  func.func @transform_7(%arg0: i32, %arg1: i32, %arg2: i32) -> (i32, i32, i32, i32) {
    %c0_i32 = arith.constant 0 : i32
    %c0_i32_0 = arith.constant 0 : i32
    %c0_i32_1 = arith.constant 0 : i32
    return %arg0, %arg1, %c0_i32, %c0_i32_0 : i32, i32, i32, i32
  }
}

</mosaic_0001>

<llo_original>
// kernel: tpu_custom_call.1
$region0: #{tpu_custom_call.1}
  #allocation0 [shape = 'u32[]', space=smem, size = 0x4, offset = 0x4, fixed_abs, tag = 'smem constant byte address 0x4 - core index']
  #allocation1 [shape = 'u32[144,128]{1,0:T(1,128)}', space=vmem, size = 0x12000, scoped, tag = 'internal scratch']
  #allocation2 [shape = 'f32[22,24]{1,0:T(8,128)}', space=vmem, size = 0x3000, scoped, tag = 'scratch operand']
  #allocation3 [shape = 'f32[1,1]{1,0:T(1,128)}', space=vmem, size = 0x200, scoped, tag = 'scratch operand']
  #allocation4 [shape = 'f32[1,1]{1,0:T(1,128)}', space=vmem, size = 0x200, scoped, tag = 'scratch operand']
  #allocation5 [shape = 'f32[1,1]{1,0:T(1,128)}', space=vmem, size = 0x200, scoped, tag = 'scratch operand']
  %s0 = inlined_call_operand.vmem [shape: bf16[2,32,22,24], index: 0, kind: input, shape index: {}]
  %s1 = inlined_call_operand.vmem [shape: s32[2,32,24], index: 1, kind: input, shape index: {}]
  %s2 = inlined_call_operand.vmem [shape: f32[2,32,24], index: 2, kind: input, shape index: {}]
  %s3 = inlined_call_operand.vmem [shape: f32[2,22,24], index: 3, kind: input, shape index: {}]
  %s4 = inlined_call_operand.vmem [shape: f32[1,22,1], index: 4, kind: input, shape index: {}]
  %s5 = inlined_call_operand.vmem [shape: f32[2,1,24], index: 5, kind: input, shape index: {}]
  %s6 = inlined_call_operand.vmem [shape: f32[2,22,24], index: 6, kind: input, shape index: {}]
  %s7 = inlined_call_operand.hbm [shape: f32[2,1,1,8], index: 7, kind: output, shape index: {}]
  %s8 = sld [smem:[#allocation0]]
  $region76: #{tpu_custom_call.1} parent=0
    _
  %s10 = ssub.s32 1, %s8
  %s11 = scalar_select 0, %s10, %s8
  $region1: #{tpu_custom_call.1} parent=0
    #allocation6 [shape = 'u8[1024]{0}', space=vmem, size = 0x400, scoped, tag = 'output window, operand 0']
    #allocation7 [shape = 's32[2]{0}', space=sflag, size = 0x8, scoped, tag = 'scoped memory for tpu_custom_call.1']
    %12 = vsyncpa [#allocation7], 0
    %s13 = scalar_lea.sflag [#allocation7], 1
    %14 = vsyncpa %s13, 0
    loop: start=0, step=1, limit=6
    $region2: #{tpu_custom_call.1} parent=1 // loop_pre_header
      _
    $region3: #{tpu_custom_call.1} parent=1 // loop_header
      %s16 = sphi 0, %s20
      %p17 = scmp.ge.s32.totalorder %s16, 6
      %s23 = sphi 0, %s42
      %s24 = sphi 0, %s38
      %s25 = sphi 0, %s34
      %s26 = sphi 0, %s23
      %s27 = sphi 0, %s24
      %s28 = sphi 0, %s25
      %s29 = sphi 0, %s26
      %s30 = sphi 0, %s27
      %s31 = sphi 0, %s28
      %s49 = sphi 0, %s51
      %s52 = sphi 0, %s49
      %s53 = sphi 0, %s52
      %s69 = sphi 0, %s53
      %s79 = sphi 0, %s81
      %s82 = sphi 0, %s79
      %s83 = sphi 0, %s82
      %s99 = sphi 0, %s83
      %s109 = sphi 0, %s111
      %s112 = sphi 0, %s109
      %s113 = sphi 0, %s112
      %s129 = sphi 0, %s113
      %s137 = sphi 0, %s139
      %s140 = sphi 0, %s137
      %s141 = sphi 0, %s140
      %s157 = sphi 0, %s141
      %s161 = sphi 0, %s161
      %s163 = sphi 0, %s161
      %s164 = sphi 0, %s163
      %s178 = sphi 0, %s164
      %s186 = sphi 0, %s188
      %s189 = sphi 0, %s186
      %s190 = sphi 0, %s189
      %s206 = sphi 0, %s190
      %s214 = sphi 0, %s216
      %s217 = sphi 0, %s214
      %s218 = sphi 0, %s217
      %s234 = sphi 0, %s218
      %s242 = sphi 0, %s244
      %s245 = sphi 0, %s242
      %s246 = sphi 0, %s245
      %s262 = sphi 0, %s246
    $region4: #{tpu_custom_call.1} parent=1 // loop_header_branch
      %19 = sbr.rel (%p17) target = $region8
    $region5: #{tpu_custom_call.1} parent=1 // loop_body
      %s21 = ssub.s32 %s16, 1
      %s22 = ssub.s32 %s16, 2
      %s32 = sadd.s32 1, %s25
      %p33 = scmp.ge.s32.totalorder %s32, 2
      %s34 = scalar_select %p33, 0, %s32
      %s35 = sadd.s32 1, %s24
      %s36 = scalar_select %p33, %s35, %s24
      %p37 = scmp.ge.s32.totalorder %s36, 1
      %s38 = scalar_select %p37, 0, %s36
      %s39 = sadd.s32 1, %s23
      %s40 = scalar_select %p37, %s39, %s23
      %p41 = scmp.ge.s32.totalorder %s40, 2
      %s42 = scalar_select %p41, 0, %s40
      %s43 = ssub.s32 %s23, %s42
      %s44 = ssub.s32 %s25, %s34
      %s45 = sor.u32 %s43, %s44
      %s46 = ssub.s32 %s24, %s38
      %s47 = sor.u32 %s45, %s46
      %p48 = scmp.eq.s32.totalorder %s47, 0
      %s50 = sadd.s32 %s49, 1
      %s51 = scalar_select %p48, %s49, %s50
      %p54 = pneg %p48
      %p55 = scmp.eq.s32.totalorder %s16, 3
      %p56 = por %p54, %p55
      %p57 = scmp.ne.s32.totalorder %s49, %s52
      %p58 = scmp.eq.s32.totalorder %s16, 0
      %p59 = por %p57, %p58
      %p60 = scmp.ne.s32.totalorder %s49, %s52
      %p61 = scmp.eq.s32.totalorder %s21, 3
      %p62 = por %p60, %p61
      %p63 = scmp.ne.s32.totalorder %s52, %s53
      %p64 = scmp.eq.s32.totalorder %s21, 0
      %p65 = por %p63, %p64
      %p66 = scmp.ne.s32.totalorder %s52, %s53
      %p67 = scmp.eq.s32.totalorder %s22, 3
      %p68 = por %p66, %p67
      %p70 = scmp.ne.s32.totalorder %s53, %s69
      %p71 = scmp.eq.s32.totalorder %s22, 0
      %p72 = por %p70, %p71
      %s73 = ssub.s32 %s23, %s42
      %s74 = ssub.s32 %s25, %s34
      %s75 = sor.u32 %s73, %s74
      %s76 = ssub.s32 %s24, %s38
      %s77 = sor.u32 %s75, %s76
      %p78 = scmp.eq.s32.totalorder %s77, 0
      %s80 = sadd.s32 %s79, 1
      %s81 = scalar_select %p78, %s79, %s80
      %p84 = pneg %p78
      %p85 = scmp.eq.s32.totalorder %s16, 3
      %p86 = por %p84, %p85
      %p87 = scmp.ne.s32.totalorder %s79, %s82
      %p88 = scmp.eq.s32.totalorder %s16, 0
      %p89 = por %p87, %p88
      %p90 = scmp.ne.s32.totalorder %s79, %s82
      %p91 = scmp.eq.s32.totalorder %s21, 3
      %p92 = por %p90, %p91
      %p93 = scmp.ne.s32.totalorder %s82, %s83
      %p94 = scmp.eq.s32.totalorder %s21, 0
      %p95 = por %p93, %p94
      %p96 = scmp.ne.s32.totalorder %s82, %s83
      %p97 = scmp.eq.s32.totalorder %s22, 3
      %p98 = por %p96, %p97
      %p100 = scmp.ne.s32.totalorder %s83, %s99
      %p101 = scmp.eq.s32.totalorder %s22, 0
      %p102 = por %p100, %p101
      %s103 = ssub.s32 %s23, %s42
      %s104 = ssub.s32 %s25, %s34
      %s105 = sor.u32 %s103, %s104
      %s106 = ssub.s32 %s24, %s38
      %s107 = sor.u32 %s105, %s106
      %p108 = scmp.eq.s32.totalorder %s107, 0
      %s110 = sadd.s32 %s109, 1
      %s111 = scalar_select %p108, %s109, %s110
      %p114 = pneg %p108
      %p115 = scmp.eq.s32.totalorder %s16, 3
      %p116 = por %p114, %p115
      %p117 = scmp.ne.s32.totalorder %s109, %s112
      %p118 = scmp.eq.s32.totalorder %s16, 0
      %p119 = por %p117, %p118
      %p120 = scmp.ne.s32.totalorder %s109, %s112
      %p121 = scmp.eq.s32.totalorder %s21, 3
      %p122 = por %p120, %p121
      %p123 = scmp.ne.s32.totalorder %s112, %s113
      %p124 = scmp.eq.s32.totalorder %s21, 0
      %p125 = por %p123, %p124
      %p126 = scmp.ne.s32.totalorder %s112, %s113
      %p127 = scmp.eq.s32.totalorder %s22, 3
      %p128 = por %p126, %p127
      %p130 = scmp.ne.s32.totalorder %s113, %s129
      %p131 = scmp.eq.s32.totalorder %s22, 0
      %p132 = por %p130, %p131
      %s133 = ssub.s32 %s23, %s42
      %s134 = ssub.s32 %s24, %s38
      %s135 = sor.u32 %s133, %s134
      %p136 = scmp.eq.s32.totalorder %s135, 0
      %s138 = sadd.s32 %s137, 1
      %s139 = scalar_select %p136, %s137, %s138
      %p142 = pneg %p136
      %p143 = scmp.eq.s32.totalorder %s16, 3
      %p144 = por %p142, %p143
      %p145 = scmp.ne.s32.totalorder %s137, %s140
      %p146 = scmp.eq.s32.totalorder %s16, 0
      %p147 = por %p145, %p146
      %p148 = scmp.ne.s32.totalorder %s137, %s140
      %p149 = scmp.eq.s32.totalorder %s21, 3
      %p150 = por %p148, %p149
      %p151 = scmp.ne.s32.totalorder %s140, %s141
      %p152 = scmp.eq.s32.totalorder %s21, 0
      %p153 = por %p151, %p152
      %p154 = scmp.ne.s32.totalorder %s140, %s141
      %p155 = scmp.eq.s32.totalorder %s22, 3
      %p156 = por %p154, %p155
      %p158 = scmp.ne.s32.totalorder %s141, %s157
      %p159 = scmp.eq.s32.totalorder %s22, 0
      %p160 = por %p158, %p159
      %s162 = sadd.s32 %s161, 1
      %p165 = scmp.eq.s32.totalorder %s16, 3
      %p166 = scmp.ne.s32.totalorder %s161, %s163
      %p167 = scmp.eq.s32.totalorder %s16, 0
      %p168 = por %p166, %p167
      %p169 = scmp.ne.s32.totalorder %s161, %s163
      %p170 = scmp.eq.s32.totalorder %s21, 3
      %p171 = por %p169, %p170
      %p172 = scmp.ne.s32.totalorder %s163, %s164
      %p173 = scmp.eq.s32.totalorder %s21, 0
      %p174 = por %p172, %p173
      %p175 = scmp.ne.s32.totalorder %s163, %s164
      %p176 = scmp.eq.s32.totalorder %s22, 3
      %p177 = por %p175, %p176
      %p179 = scmp.ne.s32.totalorder %s164, %s178
      %p180 = scmp.eq.s32.totalorder %s22, 0
      %p181 = por %p179, %p180
      %s182 = ssub.s32 %s23, %s42
      %s183 = ssub.s32 %s24, %s38
      %s184 = sor.u32 %s182, %s183
      %p185 = scmp.eq.s32.totalorder %s184, 0
      %s187 = sadd.s32 %s186, 1
      %s188 = scalar_select %p185, %s186, %s187
      %p191 = pneg %p185
      %p192 = scmp.eq.s32.totalorder %s16, 3
      %p193 = por %p191, %p192
      %p194 = scmp.ne.s32.totalorder %s186, %s189
      %p195 = scmp.eq.s32.totalorder %s16, 0
      %p196 = por %p194, %p195
      %p197 = scmp.ne.s32.totalorder %s186, %s189
      %p198 = scmp.eq.s32.totalorder %s21, 3
      %p199 = por %p197, %p198
      %p200 = scmp.ne.s32.totalorder %s189, %s190
      %p201 = scmp.eq.s32.totalorder %s21, 0
      %p202 = por %p200, %p201
      %p203 = scmp.ne.s32.totalorder %s189, %s190
      %p204 = scmp.eq.s32.totalorder %s22, 3
      %p205 = por %p203, %p204
      %p207 = scmp.ne.s32.totalorder %s190, %s206
      %p208 = scmp.eq.s32.totalorder %s22, 0
      %p209 = por %p207, %p208
      %s210 = ssub.s32 %s23, %s42
      %s211 = ssub.s32 %s24, %s38
      %s212 = sor.u32 %s210, %s211
      %p213 = scmp.eq.s32.totalorder %s212, 0
      %s215 = sadd.s32 %s214, 1
      %s216 = scalar_select %p213, %s214, %s215
      %p219 = pneg %p213
      %p220 = scmp.eq.s32.totalorder %s16, 3
      %p221 = por %p219, %p220
      %p222 = scmp.ne.s32.totalorder %s214, %s217
      %p223 = scmp.eq.s32.totalorder %s16, 0
      %p224 = por %p222, %p223
      %p225 = scmp.ne.s32.totalorder %s214, %s217
      %p226 = scmp.eq.s32.totalorder %s21, 3
      %p227 = por %p225, %p226
      %p228 = scmp.ne.s32.totalorder %s217, %s218
      %p229 = scmp.eq.s32.totalorder %s21, 0
      %p230 = por %p228, %p229
      %p231 = scmp.ne.s32.totalorder %s217, %s218
      %p232 = scmp.eq.s32.totalorder %s22, 3
      %p233 = por %p231, %p232
      %p235 = scmp.ne.s32.totalorder %s218, %s234
      %p236 = scmp.eq.s32.totalorder %s22, 0
      %p237 = por %p235, %p236
      %s238 = ssub.s32 %s23, %s42
      %s239 = ssub.s32 %s24, %s38
      %s240 = sor.u32 %s238, %s239
      %p241 = scmp.eq.s32.totalorder %s240, 0
      %s243 = sadd.s32 %s242, 1
      %s244 = scalar_select %p241, %s242, %s243
      %p247 = pneg %p241
      %p248 = scmp.eq.s32.totalorder %s16, 3
      %p249 = por %p247, %p248
      %p250 = scmp.ne.s32.totalorder %s242, %s245
      %p251 = scmp.eq.s32.totalorder %s16, 0
      %p252 = por %p250, %p251
      %p253 = scmp.ne.s32.totalorder %s242, %s245
      %p254 = scmp.eq.s32.totalorder %s21, 3
      %p255 = por %p253, %p254
      %p256 = scmp.ne.s32.totalorder %s245, %s246
      %p257 = scmp.eq.s32.totalorder %s21, 0
      %p258 = por %p256, %p257
      %p259 = scmp.ne.s32.totalorder %s245, %s246
      %p260 = scmp.eq.s32.totalorder %s22, 3
      %p261 = por %p259, %p260
      %p263 = scmp.ne.s32.totalorder %s246, %s262
      %p264 = scmp.eq.s32.totalorder %s22, 0
      %p265 = por %p263, %p264
      %p266 = scmp.le.s32.totalorder 1, %s16
      %p267 = scmp.lt.s32.totalorder %s16, 5
      %p268 = pnand %p266, %p267
      %p269 = pneg %p268
      // Predicated region
      $region9: #{tpu_custom_call.1} parent=5 // pred_check
        _
      $region10: #{tpu_custom_call.1} parent=5 // pred_check_branch
        %271 = sbr.rel (%p268) target = $region12
      $region11: #{tpu_custom_call.1} parent=5 // pred_region
        %s272 = ssub.s32 %s16, 1
        // Predicated region
        $region13: #{tpu_custom_call.1} parent=11 // pred_check
          %p273 = pneg %p174
        $region14: #{tpu_custom_call.1} parent=11 // pred_check_branch
          %275 = sbr.rel (%p273) target = $region16
        $region15: #{tpu_custom_call.1} parent=11 // pred_region
          _
        $region16: #{tpu_custom_call.1} parent=11 // pred_fallthru
          _
      $region12: #{tpu_custom_call.1} parent=5 // pred_fallthru
        _
      %p276 = scmp.lt.s32.totalorder %s16, 4
      // Predicated region
      $region17: #{tpu_custom_call.1} parent=5 // pred_check
        %p277 = pneg %p276
      $region18: #{tpu_custom_call.1} parent=5 // pred_check_branch
        %279 = sbr.rel (%p277) target = $region20
      $region19: #{tpu_custom_call.1} parent=5 // pred_region
        // Predicated region
        $region21: #{tpu_custom_call.1} parent=19 // pred_check
          %p280 = pneg %p59
        $region22: #{tpu_custom_call.1} parent=19 // pred_check_branch
          %282 = sbr.rel (%p280) target = $region24
        $region23: #{tpu_custom_call.1} parent=19 // pred_region
          %s283 = smul.u32 16, %s25
          %p284 = scmp.lt.s32.totalorder %s23, 1
          %s285 = scalar_select %p284, %s23, 1
          %p286 = scmp.lt.s32.totalorder %s283, 31
          %s287 = scalar_select %p286, %s283, 31
          %p288 = scmp.lt.s32.totalorder %s24, 0
          %s289 = scalar_select %p288, %s24, 0
          %s290 = smul.addr %s287, 3
          %s291 = sadd.s32 %s289, %s290
          %s292 = smul.addr %s285, 96
          %s293 = sadd.s32 %s291, %s292
          %s294 = smul.addr %s293, 4
          %s295 = scalar_lea.vmem %s0, %s294
          %s296 = smul.u32 16, %s25
        $region24: #{tpu_custom_call.1} parent=19 // pred_fallthru
          _
        // Predicated region
        $region25: #{tpu_custom_call.1} parent=19 // pred_check
          %p297 = pneg %p89
        $region26: #{tpu_custom_call.1} parent=19 // pred_check_branch
          %299 = sbr.rel (%p297) target = $region28
        $region27: #{tpu_custom_call.1} parent=19 // pred_region
          %s300 = smul.u32 2, %s25
          %p301 = scmp.lt.s32.totalorder %s23, 1
          %s302 = scalar_select %p301, %s23, 1
          %p303 = scmp.lt.s32.totalorder %s300, 3
          %s304 = scalar_select %p303, %s300, 3
          %p305 = scmp.lt.s32.totalorder %s24, 0
          %s306 = scalar_select %p305, %s24, 0
          %s307 = sadd.s32 %s306, %s304
          %s308 = smul.addr %s302, 4
          %s309 = sadd.s32 %s307, %s308
          %s310 = smul.addr %s309, 8
          %s311 = scalar_lea.vmem %s1, %s310
          %s312 = smul.u32 2, %s25
        $region28: #{tpu_custom_call.1} parent=19 // pred_fallthru
          _
        // Predicated region
        $region29: #{tpu_custom_call.1} parent=19 // pred_check
          %p313 = pneg %p119
        $region30: #{tpu_custom_call.1} parent=19 // pred_check_branch
          %315 = sbr.rel (%p313) target = $region32
        $region31: #{tpu_custom_call.1} parent=19 // pred_region
          %s316 = smul.u32 2, %s25
          %p317 = scmp.lt.s32.totalorder %s23, 1
          %s318 = scalar_select %p317, %s23, 1
          %p319 = scmp.lt.s32.totalorder %s316, 3
          %s320 = scalar_select %p319, %s316, 3
          %p321 = scmp.lt.s32.totalorder %s24, 0
          %s322 = scalar_select %p321, %s24, 0
          %s323 = sadd.s32 %s322, %s320
          %s324 = smul.addr %s318, 4
          %s325 = sadd.s32 %s323, %s324
          %s326 = smul.addr %s325, 8
          %s327 = scalar_lea.vmem %s2, %s326
          %s328 = smul.u32 2, %s25
        $region32: #{tpu_custom_call.1} parent=19 // pred_fallthru
          _
        // Predicated region
        $region33: #{tpu_custom_call.1} parent=19 // pred_check
          %p329 = pneg %p147
        $region34: #{tpu_custom_call.1} parent=19 // pred_check_branch
          %331 = sbr.rel (%p329) target = $region36
        $region35: #{tpu_custom_call.1} parent=19 // pred_region
          %p332 = scmp.lt.s32.totalorder %s23, 1
          %s333 = scalar_select %p332, %s23, 1
          %p334 = scmp.lt.s32.totalorder %s24, 0
          %s335 = scalar_select %p334, %s24, 0
          %s336 = smul.addr %s333, 3
          %s337 = sadd.s32 %s335, %s336
          %s338 = smul.addr %s337, 8
          %s339 = scalar_lea.vmem %s3, %s338
        $region36: #{tpu_custom_call.1} parent=19 // pred_fallthru
          _
        // Predicated region
        $region37: #{tpu_custom_call.1} parent=19 // pred_check
          %p340 = pneg %p196
        $region38: #{tpu_custom_call.1} parent=19 // pred_check_branch
          %342 = sbr.rel (%p340) target = $region40
        $region39: #{tpu_custom_call.1} parent=19 // pred_region
          %p343 = scmp.lt.s32.totalorder %s23, 1
          %s344 = scalar_select %p343, %s23, 1
          %p345 = scmp.lt.s32.totalorder %s24, 0
          %s346 = scalar_select %p345, %s24, 0
          %s347 = sadd.s32 %s346, %s344
          %s348 = scalar_lea.vmem %s5, %s347
        $region40: #{tpu_custom_call.1} parent=19 // pred_fallthru
          _
        // Predicated region
        $region41: #{tpu_custom_call.1} parent=19 // pred_check
          %p349 = pneg %p224
        $region42: #{tpu_custom_call.1} parent=19 // pred_check_branch
          %351 = sbr.rel (%p349) target = $region44
        $region43: #{tpu_custom_call.1} parent=19 // pred_region
          %p352 = scmp.lt.s32.totalorder %s23, 1
          %s353 = scalar_select %p352, %s23, 1
          %p354 = scmp.lt.s32.totalorder %s24, 0
          %s355 = scalar_select %p354, %s24, 0
          %s356 = smul.addr %s353, 3
          %s357 = sadd.s32 %s355, %s356
          %s358 = smul.addr %s357, 8
          %s359 = scalar_lea.vmem %s6, %s358
        $region44: #{tpu_custom_call.1} parent=19 // pred_fallthru
          _
      $region20: #{tpu_custom_call.1} parent=5 // pred_fallthru
        _
      %p360 = scmp.le.s32.totalorder 1, %s16
      %p361 = scmp.lt.s32.totalorder %s16, 5
      %p362 = pnand %p360, %p361
      %p363 = pneg %p362
      // Predicated region
      $region45: #{tpu_custom_call.1} parent=5 // pred_check
        _
      $region46: #{tpu_custom_call.1} parent=5 // pred_check_branch
        %365 = sbr.rel (%p362) target = $region48
      $region47: #{tpu_custom_call.1} parent=5 // pred_region
        %s366 = ssub.s32 %s16, 1
        %s367 = smul.u32 16, %s28
        %p368 = scmp.lt.s32.totalorder %s26, 1
        %s369 = scalar_select %p368, %s26, 1
        %p370 = scmp.lt.s32.totalorder %s367, 31
        %s371 = scalar_select %p370, %s367, 31
        %p372 = scmp.lt.s32.totalorder %s27, 0
        %s373 = scalar_select %p372, %s27, 0
        %s374 = smul.addr %s371, 3
        %s375 = sadd.s32 %s373, %s374
        %s376 = smul.addr %s369, 96
        %s377 = sadd.s32 %s375, %s376
        %s378 = smul.addr %s377, 4
        %s379 = scalar_lea.vmem %s0, %s378
        %p380 = pneg %p65
        %p381 = pneg %p62
        %s382 = smul.u32 2, %s28
        %p383 = scmp.lt.s32.totalorder %s26, 1
        %s384 = scalar_select %p383, %s26, 1
        %p385 = scmp.lt.s32.totalorder %s382, 3
        %s386 = scalar_select %p385, %s382, 3
        %p387 = scmp.lt.s32.totalorder %s27, 0
        %s388 = scalar_select %p387, %s27, 0
        %s389 = sadd.s32 %s388, %s386
        %s390 = smul.addr %s384, 4
        %s391 = sadd.s32 %s389, %s390
        %s392 = smul.addr %s391, 8
        %s393 = scalar_lea.vmem %s1, %s392
        %p394 = pneg %p95
        %p395 = pneg %p92
        %s396 = smul.u32 2, %s28
        %p397 = scmp.lt.s32.totalorder %s26, 1
        %s398 = scalar_select %p397, %s26, 1
        %p399 = scmp.lt.s32.totalorder %s396, 3
        %s400 = scalar_select %p399, %s396, 3
        %p401 = scmp.lt.s32.totalorder %s27, 0
        %s402 = scalar_select %p401, %s27, 0
        %s403 = sadd.s32 %s402, %s400
        %s404 = smul.addr %s398, 4
        %s405 = sadd.s32 %s403, %s404
        %s406 = smul.addr %s405, 8
        %s407 = scalar_lea.vmem %s2, %s406
        %p408 = pneg %p125
        %p409 = pneg %p122
        %p410 = scmp.lt.s32.totalorder %s26, 1
        %s411 = scalar_select %p410, %s26, 1
        %p412 = scmp.lt.s32.totalorder %s27, 0
        %s413 = scalar_select %p412, %s27, 0
        %s414 = smul.addr %s411, 3
        %s415 = sadd.s32 %s413, %s414
        %s416 = smul.addr %s415, 8
        %s417 = scalar_lea.vmem %s3, %s416
        %p418 = pneg %p153
        %p419 = pneg %p150
        %p420 = pneg %p174
        %p421 = pneg %p171
        %p422 = scmp.lt.s32.totalorder %s26, 1
        %s423 = scalar_select %p422, %s26, 1
        %p424 = scmp.lt.s32.totalorder %s27, 0
        %s425 = scalar_select %p424, %s27, 0
        %s426 = sadd.s32 %s425, %s423
        %s427 = scalar_lea.vmem %s5, %s426
        %p428 = pneg %p202
        %p429 = pneg %p199
        %p430 = scmp.lt.s32.totalorder %s26, 1
        %s431 = scalar_select %p430, %s26, 1
        %p432 = scmp.lt.s32.totalorder %s27, 0
        %s433 = scalar_select %p432, %s27, 0
        %s434 = smul.addr %s431, 3
        %s435 = sadd.s32 %s433, %s434
        %s436 = smul.addr %s435, 8
        %s437 = scalar_lea.vmem %s6, %s436
        %p438 = pneg %p230
        %p439 = pneg %p227
        %p440 = pneg %p258
        %p441 = pneg %p255
        %s442 = sand.u32 %s245, 1
        %s443 = scalar_lea.sflag [#allocation7], %s442
        %s444 = sand.u32 %s245, 1
        %s445 = scalar_lea.vmem [#allocation6], %s444
        %s446 = smul.u32 16, %s28
        %p447 = scmp.lt.s32.totalorder %s26, 1
        %s448 = scalar_select %p447, %s26, 1
        %p449 = scmp.lt.s32.totalorder %s446, 31
        %s450 = scalar_select %p449, %s446, 31
        %p451 = scmp.lt.s32.totalorder %s27, 0
        %s452 = scalar_select %p451, %s27, 0
        %s453 = smul.addr %s450, 3
        %s454 = sadd.s32 %s452, %s453
        %s455 = smul.addr %s448, 96
        %s456 = sadd.s32 %s454, %s455
        %s457 = smul.addr %s456, 4
        %s458 = scalar_lea.vmem %s0, %s457
        %s459 = smul.u32 16, %s28
        %s460 = smul.u32 2, %s28
        %p461 = scmp.lt.s32.totalorder %s26, 1
        %s462 = scalar_select %p461, %s26, 1
        %p463 = scmp.lt.s32.totalorder %s460, 3
        %s464 = scalar_select %p463, %s460, 3
        %p465 = scmp.lt.s32.totalorder %s27, 0
        %s466 = scalar_select %p465, %s27, 0
        %s467 = sadd.s32 %s466, %s464
        %s468 = smul.addr %s462, 4
        %s469 = sadd.s32 %s467, %s468
        %s470 = smul.addr %s469, 8
        %s471 = scalar_lea.vmem %s1, %s470
        %s472 = smul.u32 2, %s28
        %s473 = smul.u32 2, %s28
        %p474 = scmp.lt.s32.totalorder %s26, 1
        %s475 = scalar_select %p474, %s26, 1
        %p476 = scmp.lt.s32.totalorder %s473, 3
        %s477 = scalar_select %p476, %s473, 3
        %p478 = scmp.lt.s32.totalorder %s27, 0
        %s479 = scalar_select %p478, %s27, 0
        %s480 = sadd.s32 %s479, %s477
        %s481 = smul.addr %s475, 4
        %s482 = sadd.s32 %s480, %s481
        %s483 = smul.addr %s482, 8
        %s484 = scalar_lea.vmem %s2, %s483
        %s485 = smul.u32 2, %s28
        %p486 = scmp.lt.s32.totalorder %s26, 1
        %s487 = scalar_select %p486, %s26, 1
        %p488 = scmp.lt.s32.totalorder %s27, 0
        %s489 = scalar_select %p488, %s27, 0
        %s490 = smul.addr %s487, 3
        %s491 = sadd.s32 %s489, %s490
        %s492 = smul.addr %s491, 8
        %s493 = scalar_lea.vmem %s3, %s492
        %p494 = scmp.lt.s32.totalorder %s26, 1
        %s495 = scalar_select %p494, %s26, 1
        %p496 = scmp.lt.s32.totalorder %s27, 0
        %s497 = scalar_select %p496, %s27, 0
        %s498 = sadd.s32 %s497, %s495
        %s499 = scalar_lea.vmem %s5, %s498
        %p500 = scmp.lt.s32.totalorder %s26, 1
        %s501 = scalar_select %p500, %s26, 1
        %p502 = scmp.lt.s32.totalorder %s27, 0
        %s503 = scalar_select %p502, %s27, 0
        %s504 = smul.addr %s501, 3
        %s505 = sadd.s32 %s503, %s504
        %s506 = smul.addr %s505, 8
        %s507 = scalar_lea.vmem %s6, %s506
        %p508 = scmp.eq.s32.totalorder %s28, 0
        // Predicated region
        $region49: #{tpu_custom_call.1} parent=47 // pred_check
          %p509 = pneg %p508
        $region50: #{tpu_custom_call.1} parent=47 // pred_check_branch
          %511 = sbr.rel (%p509) target = $region52
        $region51: #{tpu_custom_call.1} parent=47 // pred_region
          %vm512 = vcmask 195584
          %513 = vst.msk [vmem:[#allocation2] sm:$0xff] %vm512, 0.0
          %514 = vst.msk [vmem:[#allocation2 + $0x8] sm:$0xff] %vm512, 0.0
          %vm515 = vcmask 193536
          %516 = vst.msk [vmem:[#allocation2 + $0x10] sm:$0x3f] %vm515, 0.0
          %vm517 = vcmask 0
          %518 = vst.msk [vmem:[#allocation3] sm:$0x1] %vm517, 0.0
          %519 = vst.msk [vmem:[#allocation4] sm:$0x1] %vm517, 0.0
          %520 = vst.msk [vmem:[#allocation5] sm:$0x1] %vm517, 0.0
        $region52: #{tpu_custom_call.1} parent=47 // pred_fallthru
          _
        %v521 = vld [vmem:[%s4] sm:$0xff]
        %v522 = vld [vmem:[%s4 + $0x8] sm:$0xff]
        %v523 = vld [vmem:[%s4 + $0x10] sm:$0x3f]
        %v524 = vlaneseq
        %v525 = vshrl.u32 %v524, 7
        %v526 = vadd.s32 %v525, 8
        %v527 = vadd.s32 %v525, 16
        loop: start=0, step=1, limit=2
        $region53: #{tpu_custom_call.1} parent=47 // loop_pre_header
          _
        $region54: #{tpu_custom_call.1} parent=47 // loop_header
          %s529 = sphi 0, %s533
          %p530 = scmp.ge.s32.totalorder %s529, 2
        $region55: #{tpu_custom_call.1} parent=47 // loop_header_branch
          %532 = sbr.rel (%p530) target = $region59
        $region56: #{tpu_custom_call.1} parent=47 // loop_body
          %s534 = smul.u32 %s529, 8
          %s535 = smul.u32 %s534, 3
          %s536 = smul.addr %s535, 4
          %s537 = scalar_lea.vmem %s458, %s536
          %v538 = vld [vmem:[%s537] sm:$0xf]
          %v539 = vld [vmem:[%s537 + $0x4] sm:$0xf]
          %v540 = vld [vmem:[%s537 + $0x8] sm:$0x7]
          %v541 = vld [vmem:[%s537 + $0xc] sm:$0xf]
          %v542 = vld [vmem:[%s537 + $0x10] sm:$0xf]
          %v543 = vld [vmem:[%s537 + $0x14] sm:$0x7]
          %v544 = vld [vmem:[%s537 + $0x18] sm:$0xf]
          %v545 = vld [vmem:[%s537 + $0x1c] sm:$0xf]
          %v546 = vld [vmem:[%s537 + $0x20] sm:$0x7]
          %v547 = vld [vmem:[%s537 + $0x24] sm:$0xf]
          %v548 = vld [vmem:[%s537 + $0x28] sm:$0xf]
          %v549 = vld [vmem:[%s537 + $0x2c] sm:$0x7]
          %v550 = vld [vmem:[%s537 + $0x30] sm:$0xf]
          %v551 = vld [vmem:[%s537 + $0x34] sm:$0xf]
          %v552 = vld [vmem:[%s537 + $0x38] sm:$0x7]
          %v553 = vld [vmem:[%s537 + $0x3c] sm:$0xf]
          %v554 = vld [vmem:[%s537 + $0x40] sm:$0xf]
          %v555 = vld [vmem:[%s537 + $0x44] sm:$0x7]
          %v556 = vld [vmem:[%s537 + $0x48] sm:$0xf]
          %v557 = vld [vmem:[%s537 + $0x4c] sm:$0xf]
          %v558 = vld [vmem:[%s537 + $0x50] sm:$0x7]
          %v559 = vld [vmem:[%s537 + $0x54] sm:$0xf]
          %v560 = vld [vmem:[%s537 + $0x58] sm:$0xf]
          %v561 = vld [vmem:[%s537 + $0x5c] sm:$0x7]
          %v562 = vunpack.c.l.bf16 %v538
          %v563 = vunpack.c.l.bf16 %v539
          %v564 = vunpack.c.l.bf16 %v540
          %v565 = vunpack.c.l.bf16 %v541
          %v566 = vunpack.c.l.bf16 %v542
          %v567 = vunpack.c.l.bf16 %v543
          %v568 = vunpack.c.l.bf16 %v544
          %v569 = vunpack.c.l.bf16 %v545
          %v570 = vunpack.c.l.bf16 %v546
          %v571 = vunpack.c.l.bf16 %v547
          %v572 = vunpack.c.l.bf16 %v548
          %v573 = vunpack.c.l.bf16 %v549
          %v574 = vunpack.c.l.bf16 %v550
          %v575 = vunpack.c.l.bf16 %v551
          %v576 = vunpack.c.l.bf16 %v552
          %v577 = vunpack.c.l.bf16 %v553
          %v578 = vunpack.c.l.bf16 %v554
          %v579 = vunpack.c.l.bf16 %v555
          %v580 = vunpack.c.l.bf16 %v556
          %v581 = vunpack.c.l.bf16 %v557
          %v582 = vunpack.c.l.bf16 %v558
          %v583 = vunpack.c.l.bf16 %v559
          %v584 = vunpack.c.l.bf16 %v560
          %v585 = vunpack.c.l.bf16 %v561
          %s586 = scalar_lea.vmem %s471, %s534
          %v587 = vld [vmem:[%s586] sm:$0xff]
          %s588 = scalar_lea.vmem %s484, %s534
          %v589 = vld [vmem:[%s588] sm:$0xff]
          %vm590 = vcmask 195584
          %v591 = vsel %vm590, %v562, -inf
          %v592 = vsel %vm590, %v563, -inf
          %v593 = vmax.f32 %v591, %v592
          %vm594 = vcmask 193536
          %v595 = vsel %vm594, %v564, -inf
          %v596 = vmax.f32 %v593, %v595
          %v597 = vrot.slane %v596, 4
          %v598 = vmax.f32 %v596, %v597
          %v599 = vrot.slane %v598, 2
          %v600 = vmax.f32 %v598, %v599
          %v601 = vrot.slane %v600, 1
          %v602 = vmax.f32 %v600, %v601
          %v603 = vsel %vm590, %v565, -inf
          %v604 = vsel %vm590, %v566, -inf
          %v605 = vmax.f32 %v603, %v604
          %v606 = vsel %vm594, %v567, -inf
          %v607 = vmax.f32 %v605, %v606
          %v608 = vrot.slane %v607, 4
          %v609 = vmax.f32 %v607, %v608
          %v610 = vrot.slane %v609, 2
          %v611 = vmax.f32 %v609, %v610
          %v612 = vrot.slane %v611, 1
          %v613 = vmax.f32 %v611, %v612
          %v614 = vsel %vm590, %v568, -inf
          %v615 = vsel %vm590, %v569, -inf
          %v616 = vmax.f32 %v614, %v615
          %v617 = vsel %vm594, %v570, -inf
          %v618 = vmax.f32 %v616, %v617
          %v619 = vrot.slane %v618, 4
          %v620 = vmax.f32 %v618, %v619
          %v621 = vrot.slane %v620, 2
          %v622 = vmax.f32 %v620, %v621
          %v623 = vrot.slane %v622, 1
          %v624 = vmax.f32 %v622, %v623
          %v625 = vsel %vm590, %v571, -inf
          %v626 = vsel %vm590, %v572, -inf
          %v627 = vmax.f32 %v625, %v626
          %v628 = vsel %vm594, %v573, -inf
          %v629 = vmax.f32 %v627, %v628
          %v630 = vrot.slane %v629, 4
          %v631 = vmax.f32 %v629, %v630
          %v632 = vrot.slane %v631, 2
          %v633 = vmax.f32 %v631, %v632
          %v634 = vrot.slane %v633, 1
          %v635 = vmax.f32 %v633, %v634
          %v636 = vsel %vm590, %v574, -inf
          %v637 = vsel %vm590, %v575, -inf
          %v638 = vmax.f32 %v636, %v637
          %v639 = vsel %vm594, %v576, -inf
          %v640 = vmax.f32 %v638, %v639
          %v641 = vrot.slane %v640, 4
          %v642 = vmax.f32 %v640, %v641
          %v643 = vrot.slane %v642, 2
          %v644 = vmax.f32 %v642, %v643
          %v645 = vrot.slane %v644, 1
          %v646 = vmax.f32 %v644, %v645
          %v647 = vsel %vm590, %v577, -inf
          %v648 = vsel %vm590, %v578, -inf
          %v649 = vmax.f32 %v647, %v648
          %v650 = vsel %vm594, %v579, -inf
          %v651 = vmax.f32 %v649, %v650
          %v652 = vrot.slane %v651, 4
          %v653 = vmax.f32 %v651, %v652
          %v654 = vrot.slane %v653, 2
          %v655 = vmax.f32 %v653, %v654
          %v656 = vrot.slane %v655, 1
          %v657 = vmax.f32 %v655, %v656
          %v658 = vsel %vm590, %v580, -inf
          %v659 = vsel %vm590, %v581, -inf
          %v660 = vmax.f32 %v658, %v659
          %v661 = vsel %vm594, %v582, -inf
          %v662 = vmax.f32 %v660, %v661
          %v663 = vrot.slane %v662, 4
          %v664 = vmax.f32 %v662, %v663
          %v665 = vrot.slane %v664, 2
          %v666 = vmax.f32 %v664, %v665
          %v667 = vrot.slane %v666, 1
          %v668 = vmax.f32 %v666, %v667
          %v669 = vsel %vm590, %v583, -inf
          %v670 = vsel %vm590, %v584, -inf
          %v671 = vmax.f32 %v669, %v670
          %v672 = vsel %vm594, %v585, -inf
          %v673 = vmax.f32 %v671, %v672
          %v674 = vrot.slane %v673, 4
          %v675 = vmax.f32 %v673, %v674
          %v676 = vrot.slane %v675, 2
          %v677 = vmax.f32 %v675, %v676
          %v678 = vrot.slane %v677, 1
          %v679 = vmax.f32 %v677, %v678
          %v680 = vsub.f32 %v562, %v602
          %v681 = vsub.f32 %v563, %v602
          %v682 = vsub.f32 %v564, %v602
          %v683 = vsub.f32 %v565, %v613
          %v684 = vsub.f32 %v566, %v613
          %v685 = vsub.f32 %v567, %v613
          %v686 = vsub.f32 %v568, %v624
          %v687 = vsub.f32 %v569, %v624
          %v688 = vsub.f32 %v570, %v624
          %v689 = vsub.f32 %v571, %v635
          %v690 = vsub.f32 %v572, %v635
          %v691 = vsub.f32 %v573, %v635
          %v692 = vsub.f32 %v574, %v646
          %v693 = vsub.f32 %v575, %v646
          %v694 = vsub.f32 %v576, %v646
          %v695 = vsub.f32 %v577, %v657
          %v696 = vsub.f32 %v578, %v657
          %v697 = vsub.f32 %v579, %v657
          %v698 = vsub.f32 %v580, %v668
          %v699 = vsub.f32 %v581, %v668
          %v700 = vsub.f32 %v582, %v668
          %v701 = vsub.f32 %v583, %v679
          %v702 = vsub.f32 %v584, %v679
          %v703 = vsub.f32 %v585, %v679
          %v704 = vmul.f32 %v680, 1.442695
          %v705 = vpow.pop %v704
          %v706 = vmul.f32 %v681, 1.442695
          %v707 = vpow.pop %v706
          %v708 = vmul.f32 %v682, 1.442695
          %v709 = vpow.pop %v708
          %v710 = vmul.f32 %v683, 1.442695
          %v711 = vpow.pop %v710
          %v712 = vmul.f32 %v684, 1.442695
          %v713 = vpow.pop %v712
          %v714 = vmul.f32 %v685, 1.442695
          %v715 = vpow.pop %v714
          %v716 = vmul.f32 %v686, 1.442695
          %v717 = vpow.pop %v716
          %v718 = vmul.f32 %v687, 1.442695
          %v719 = vpow.pop %v718
          %v720 = vmul.f32 %v688, 1.442695
          %v721 = vpow.pop %v720
          %v722 = vmul.f32 %v689, 1.442695
          %v723 = vpow.pop %v722
          %v724 = vmul.f32 %v690, 1.442695
          %v725 = vpow.pop %v724
          %v726 = vmul.f32 %v691, 1.442695
          %v727 = vpow.pop %v726
          %v728 = vmul.f32 %v692, 1.442695
          %v729 = vpow.pop %v728
          %v730 = vmul.f32 %v693, 1.442695
          %v731 = vpow.pop %v730
          %v732 = vmul.f32 %v694, 1.442695
          %v733 = vpow.pop %v732
          %v734 = vmul.f32 %v695, 1.442695
          %v735 = vpow.pop %v734
          %v736 = vmul.f32 %v696, 1.442695
          %v737 = vpow.pop %v736
          %v738 = vmul.f32 %v697, 1.442695
          %v739 = vpow.pop %v738
          %v740 = vmul.f32 %v698, 1.442695
          %v741 = vpow.pop %v740
          %v742 = vmul.f32 %v699, 1.442695
          %v743 = vpow.pop %v742
          %v744 = vmul.f32 %v700, 1.442695
          %v745 = vpow.pop %v744
          %v746 = vmul.f32 %v701, 1.442695
          %v747 = vpow.pop %v746
          %v748 = vmul.f32 %v702, 1.442695
          %v749 = vpow.pop %v748
          %v750 = vmul.f32 %v703, 1.442695
          %v751 = vpow.pop %v750
          %v752 = vsel %vm590, %v705, 0.0
          %v753 = vsel %vm590, %v707, 0.0
          %v754 = vadd.f32 %v752, %v753
          %v755 = vsel %vm594, %v709, 0.0
          %v756 = vadd.f32 %v754, %v755
          %v757 = vrot.slane %v756, 4
          %v758 = vadd.f32 %v756, %v757
          %v759 = vrot.slane %v758, 2
          %v760 = vadd.f32 %v758, %v759
          %v761 = vrot.slane %v760, 1
          %v762 = vadd.f32 %v760, %v761
          %v763 = vsel %vm590, %v711, 0.0
          %v764 = vsel %vm590, %v713, 0.0
          %v765 = vadd.f32 %v763, %v764
          %v766 = vsel %vm594, %v715, 0.0
          %v767 = vadd.f32 %v765, %v766
          %v768 = vrot.slane %v767, 4
          %v769 = vadd.f32 %v767, %v768
          %v770 = vrot.slane %v769, 2
          %v771 = vadd.f32 %v769, %v770
          %v772 = vrot.slane %v771, 1
          %v773 = vadd.f32 %v771, %v772
          %v774 = vsel %vm590, %v717, 0.0
          %v775 = vsel %vm590, %v719, 0.0
          %v776 = vadd.f32 %v774, %v775
          %v777 = vsel %vm594, %v721, 0.0
          %v778 = vadd.f32 %v776, %v777
          %v779 = vrot.slane %v778, 4
          %v780 = vadd.f32 %v778, %v779
          %v781 = vrot.slane %v780, 2
          %v782 = vadd.f32 %v780, %v781
          %v783 = vrot.slane %v782, 1
          %v784 = vadd.f32 %v782, %v783
          %v785 = vsel %vm590, %v723, 0.0
          %v786 = vsel %vm590, %v725, 0.0
          %v787 = vadd.f32 %v785, %v786
          %v788 = vsel %vm594, %v727, 0.0
          %v789 = vadd.f32 %v787, %v788
          %v790 = vrot.slane %v789, 4
          %v791 = vadd.f32 %v789, %v790
          %v792 = vrot.slane %v791, 2
          %v793 = vadd.f32 %v791, %v792
          %v794 = vrot.slane %v793, 1
          %v795 = vadd.f32 %v793, %v794
          %v796 = vsel %vm590, %v729, 0.0
          %v797 = vsel %vm590, %v731, 0.0
          %v798 = vadd.f32 %v796, %v797
          %v799 = vsel %vm594, %v733, 0.0
          %v800 = vadd.f32 %v798, %v799
          %v801 = vrot.slane %v800, 4
          %v802 = vadd.f32 %v800, %v801
          %v803 = vrot.slane %v802, 2
          %v804 = vadd.f32 %v802, %v803
          %v805 = vrot.slane %v804, 1
          %v806 = vadd.f32 %v804, %v805
          %v807 = vsel %vm590, %v735, 0.0
          %v808 = vsel %vm590, %v737, 0.0
          %v809 = vadd.f32 %v807, %v808
          %v810 = vsel %vm594, %v739, 0.0
          %v811 = vadd.f32 %v809, %v810
          %v812 = vrot.slane %v811, 4
          %v813 = vadd.f32 %v811, %v812
          %v814 = vrot.slane %v813, 2
          %v815 = vadd.f32 %v813, %v814
          %v816 = vrot.slane %v815, 1
          %v817 = vadd.f32 %v815, %v816
          %v818 = vsel %vm590, %v741, 0.0
          %v819 = vsel %vm590, %v743, 0.0
          %v820 = vadd.f32 %v818, %v819
          %v821 = vsel %vm594, %v745, 0.0
          %v822 = vadd.f32 %v820, %v821
          %v823 = vrot.slane %v822, 4
          %v824 = vadd.f32 %v822, %v823
          %v825 = vrot.slane %v824, 2
          %v826 = vadd.f32 %v824, %v825
          %v827 = vrot.slane %v826, 1
          %v828 = vadd.f32 %v826, %v827
          %v829 = vsel %vm590, %v747, 0.0
          %v830 = vsel %vm590, %v749, 0.0
          %v831 = vadd.f32 %v829, %v830
          %v832 = vsel %vm594, %v751, 0.0
          %v833 = vadd.f32 %v831, %v832
          %v834 = vrot.slane %v833, 4
          %v835 = vadd.f32 %v833, %v834
          %v836 = vrot.slane %v835, 2
          %v837 = vadd.f32 %v835, %v836
          %v838 = vrot.slane %v837, 1
          %v839 = vadd.f32 %v837, %v838
          %v840 = vrcp.pop %v762
          %v841 = vrcp.pop %v773
          %v842 = vrcp.pop %v784
          %v843 = vrcp.pop %v795
          %v844 = vrcp.pop %v806
          %v845 = vrcp.pop %v817
          %v846 = vrcp.pop %v828
          %v847 = vrcp.pop %v839
          %v848 = vmul.f32 %v705, %v840
          %v849 = vmul.f32 %v707, %v840
          %v850 = vmul.f32 %v709, %v840
          %v851 = vmul.f32 %v711, %v841
          %v852 = vmul.f32 %v713, %v841
          %v853 = vmul.f32 %v715, %v841
          %v854 = vmul.f32 %v717, %v842
          %v855 = vmul.f32 %v719, %v842
          %v856 = vmul.f32 %v721, %v842
          %v857 = vmul.f32 %v723, %v843
          %v858 = vmul.f32 %v725, %v843
          %v859 = vmul.f32 %v727, %v843
          %v860 = vmul.f32 %v729, %v844
          %v861 = vmul.f32 %v731, %v844
          %v862 = vmul.f32 %v733, %v844
          %v863 = vmul.f32 %v735, %v845
          %v864 = vmul.f32 %v737, %v845
          %v865 = vmul.f32 %v739, %v845
          %v866 = vmul.f32 %v741, %v846
          %v867 = vmul.f32 %v743, %v846
          %v868 = vmul.f32 %v745, %v846
          %v869 = vmul.f32 %v747, %v847
          %v870 = vmul.f32 %v749, %v847
          %v871 = vmul.f32 %v751, %v847
          %v872 = vld [vmem:[#allocation2] sm:$0xff]
          %v873 = vld [vmem:[#allocation2 + $0x8] sm:$0xff]
          %v874 = vld [vmem:[#allocation2 + $0x10] sm:$0x3f]
          %v875 = vsel %vm590, %v848, 0.0
          %v876 = vsel %vm590, %v851, 0.0
          %v877 = vadd.f32 %v875, %v876
          %v878 = vsel %vm590, %v854, 0.0
          %v879 = vadd.f32 %v877, %v878
          %v880 = vsel %vm590, %v857, 0.0
          %v881 = vadd.f32 %v879, %v880
          %v882 = vsel %vm590, %v860, 0.0
          %v883 = vadd.f32 %v881, %v882
          %v884 = vsel %vm590, %v863, 0.0
          %v885 = vadd.f32 %v883, %v884
          %v886 = vsel %vm590, %v866, 0.0
          %v887 = vadd.f32 %v885, %v886
          %v888 = vsel %vm590, %v869, 0.0
          %v889 = vadd.f32 %v887, %v888
          %v890 = vsel %vm590, %v849, 0.0
          %v891 = vsel %vm590, %v852, 0.0
          %v892 = vadd.f32 %v890, %v891
          %v893 = vsel %vm590, %v855, 0.0
          %v894 = vadd.f32 %v892, %v893
          %v895 = vsel %vm590, %v858, 0.0
          %v896 = vadd.f32 %v894, %v895
          %v897 = vsel %vm590, %v861, 0.0
          %v898 = vadd.f32 %v896, %v897
          %v899 = vsel %vm590, %v864, 0.0
          %v900 = vadd.f32 %v898, %v899
          %v901 = vsel %vm590, %v867, 0.0
          %v902 = vadd.f32 %v900, %v901
          %v903 = vsel %vm590, %v870, 0.0
          %v904 = vadd.f32 %v902, %v903
          %v905 = vsel %vm594, %v850, 0.0
          %v906 = vsel %vm594, %v853, 0.0
          %v907 = vadd.f32 %v905, %v906
          %v908 = vsel %vm594, %v856, 0.0
          %v909 = vadd.f32 %v907, %v908
          %v910 = vsel %vm594, %v859, 0.0
          %v911 = vadd.f32 %v909, %v910
          %v912 = vsel %vm594, %v862, 0.0
          %v913 = vadd.f32 %v911, %v912
          %v914 = vsel %vm594, %v865, 0.0
          %v915 = vadd.f32 %v913, %v914
          %v916 = vsel %vm594, %v868, 0.0
          %v917 = vadd.f32 %v915, %v916
          %v918 = vsel %vm594, %v871, 0.0
          %v919 = vadd.f32 %v917, %v918
          %v920 = vadd.f32 %v872, %v889
          %v921 = vadd.f32 %v873, %v904
          %v922 = vadd.f32 %v874, %v919
          %923 = vst.msk [vmem:[#allocation2] sm:$0xff] %vm590, %v920
          %924 = vst.msk [vmem:[#allocation2 + $0x8] sm:$0xff] %vm590, %v921
          %925 = vst.msk [vmem:[#allocation2 + $0x10] sm:$0x3f] %vm594, %v922
          %v926 = vcombine.high %v587, %v587
          %v928 = vunpack.c.l.s4 1966171168
          %v929 = vunpack.c.0.s8 %v928
          %v930 = vlaneseq
          %v931 = vshrl.u32 %v930, 7
          %v932 = vsub.s32 %v929, %v931
          %v933 = vrot.slane %v587, %v932
          %v935 = vunpack.c.l.s4 1966171168
          %v936 = vunpack.c.0.s8 %v935
          %v937 = vlaneseq
          %v938 = vshrl.u32 %v937, 7
          %v939 = vsub.s32 %v936, %v938
          %v940 = vrot.slane %v926, %v939
          %v941 = vcombine.high %v933, %v933
          %v942 = vcombine.high %v940, %v940
          %v944 = vunpack.c.l.s4 1966171168
          %v945 = vunpack.c.0.s8 %v944
          %v946 = vlaneseq
          %v947 = vshrl.u32 %v946, 7
          %v948 = vsub.s32 %v945, %v947
          %v949 = vrot.slane %v933, %v948
          %v951 = vunpack.c.l.s4 1966171168
          %v952 = vunpack.c.0.s8 %v951
          %v953 = vlaneseq
          %v954 = vshrl.u32 %v953, 7
          %v955 = vsub.s32 %v952, %v954
          %v956 = vrot.slane %v940, %v955
          %v958 = vunpack.c.l.s4 1966171168
          %v959 = vunpack.c.0.s8 %v958
          %v960 = vlaneseq
          %v961 = vshrl.u32 %v960, 7
          %v962 = vsub.s32 %v959, %v961
          %v963 = vrot.slane %v941, %v962
          %v965 = vunpack.c.l.s4 1966171168
          %v966 = vunpack.c.0.s8 %v965
          %v967 = vlaneseq
          %v968 = vshrl.u32 %v967, 7
          %v969 = vsub.s32 %v966, %v968
          %v970 = vrot.slane %v942, %v969
          %v971 = vcombine.high %v949, %v949
          %v972 = vcombine.high %v956, %v956
          %v973 = vcombine.high %v963, %v963
          %v974 = vcombine.high %v970, %v970
          %v975 = vlaneseq
          %v976 = vshrl.u32 %v975, 7
          %v977 = vsub.s32 0, %v976
          %v978 = vrot.slane %v949, %v977
          %v979 = vlaneseq
          %v980 = vshrl.u32 %v979, 7
          %v981 = vsub.s32 0, %v980
          %v982 = vrot.slane %v963, %v981
          %v983 = vlaneseq
          %v984 = vshrl.u32 %v983, 7
          %v985 = vsub.s32 0, %v984
          %v986 = vrot.slane %v971, %v985
          %v987 = vlaneseq
          %v988 = vshrl.u32 %v987, 7
          %v989 = vsub.s32 0, %v988
          %v990 = vrot.slane %v973, %v989
          %v991 = vlaneseq
          %v992 = vshrl.u32 %v991, 7
          %v993 = vsub.s32 0, %v992
          %v994 = vrot.slane %v956, %v993
          %v995 = vlaneseq
          %v996 = vshrl.u32 %v995, 7
          %v997 = vsub.s32 0, %v996
          %v998 = vrot.slane %v970, %v997
          %v999 = vlaneseq
          %v1000 = vshrl.u32 %v999, 7
          %v1001 = vsub.s32 0, %v1000
          %v1002 = vrot.slane %v972, %v1001
          %v1003 = vlaneseq
          %v1004 = vshrl.u32 %v1003, 7
          %v1005 = vsub.s32 0, %v1004
          %v1006 = vrot.slane %v974, %v1005
          %vm1007 = vcmp.eq.s32.totalorder %v525, %v978
          %vm1008 = vcmp.eq.s32.totalorder %v526, %v978
          %vm1009 = vcmp.eq.s32.totalorder %v527, %v978
          %vm1010 = vcmp.eq.s32.totalorder %v525, %v982
          %vm1011 = vcmp.eq.s32.totalorder %v526, %v982
          %vm1012 = vcmp.eq.s32.totalorder %v527, %v982
          %vm1013 = vcmp.eq.s32.totalorder %v525, %v986
          %vm1014 = vcmp.eq.s32.totalorder %v526, %v986
          %vm1015 = vcmp.eq.s32.totalorder %v527, %v986
          %vm1016 = vcmp.eq.s32.totalorder %v525, %v990
          %vm1017 = vcmp.eq.s32.totalorder %v526, %v990
          %vm1018 = vcmp.eq.s32.totalorder %v527, %v990
          %vm1019 = vcmp.eq.s32.totalorder %v525, %v994
          %vm1020 = vcmp.eq.s32.totalorder %v526, %v994
          %vm1021 = vcmp.eq.s32.totalorder %v527, %v994
          %vm1022 = vcmp.eq.s32.totalorder %v525, %v998
          %vm1023 = vcmp.eq.s32.totalorder %v526, %v998
          %vm1024 = vcmp.eq.s32.totalorder %v527, %v998
          %vm1025 = vcmp.eq.s32.totalorder %v525, %v1002
          %vm1026 = vcmp.eq.s32.totalorder %v526, %v1002
          %vm1027 = vcmp.eq.s32.totalorder %v527, %v1002
          %vm1028 = vcmp.eq.s32.totalorder %v525, %v1006
          %vm1029 = vcmp.eq.s32.totalorder %v526, %v1006
          %vm1030 = vcmp.eq.s32.totalorder %v527, %v1006
          %1032 = vset.pattern.permute.xlu0 0
          %1033 = vperm.xlu0 %1032, %v521
          %v1034 = vpop.permute.xlu0 %1033
          %1037 = vset.pattern.permute.xlu0 0
          %1038 = vperm.xlu0 %1037, %v522
          %v1039 = vpop.permute.xlu0 %1038
          %1042 = vset.pattern.permute.xlu0 0
          %1043 = vperm.xlu0 %1042, %v523
          %v1044 = vpop.permute.xlu0 %1043
          %v1046 = vsel %vm1007, %v1034, 0.0
          %v1047 = vsel %vm1008, %v1039, 0.0
          %v1048 = vsel %vm1009, %v1044, 0.0
          %v1049 = vsel %vm1010, %v1034, 0.0
          %v1050 = vsel %vm1011, %v1039, 0.0
          %v1051 = vsel %vm1012, %v1044, 0.0
          %v1052 = vsel %vm1013, %v1034, 0.0
          %v1053 = vsel %vm1014, %v1039, 0.0
          %v1054 = vsel %vm1015, %v1044, 0.0
          %v1055 = vsel %vm1016, %v1034, 0.0
          %v1056 = vsel %vm1017, %v1039, 0.0
          %v1057 = vsel %vm1018, %v1044, 0.0
          %v1058 = vsel %vm1019, %v1034, 0.0
          %v1059 = vsel %vm1020, %v1039, 0.0
          %v1060 = vsel %vm1021, %v1044, 0.0
          %v1061 = vsel %vm1022, %v1034, 0.0
          %v1062 = vsel %vm1023, %v1039, 0.0
          %v1063 = vsel %vm1024, %v1044, 0.0
          %v1064 = vsel %vm1025, %v1034, 0.0
          %v1065 = vsel %vm1026, %v1039, 0.0
          %v1066 = vsel %vm1027, %v1044, 0.0
          %v1067 = vsel %vm1028, %v1034, 0.0
          %v1068 = vsel %vm1029, %v1039, 0.0
          %v1069 = vsel %vm1030, %v1044, 0.0
          %v1070 = vsel %vm590, %v1046, 0.0
          %v1071 = vsel %vm590, %v1047, 0.0
          %v1072 = vadd.f32 %v1070, %v1071
          %v1073 = vsel %vm594, %v1048, 0.0
          %v1074 = vadd.f32 %v1072, %v1073
          %v1075 = vrot.slane %v1074, 4
          %v1076 = vadd.f32 %v1074, %v1075
          %v1077 = vrot.slane %v1076, 2
          %v1078 = vadd.f32 %v1076, %v1077
          %v1079 = vrot.slane %v1078, 1
          %v1080 = vadd.f32 %v1078, %v1079
          %v1081 = vsel %vm590, %v1049, 0.0
          %v1082 = vsel %vm590, %v1050, 0.0
          %v1083 = vadd.f32 %v1081, %v1082
          %v1084 = vsel %vm594, %v1051, 0.0
          %v1085 = vadd.f32 %v1083, %v1084
          %v1086 = vrot.slane %v1085, 4
          %v1087 = vadd.f32 %v1085, %v1086
          %v1088 = vrot.slane %v1087, 2
          %v1089 = vadd.f32 %v1087, %v1088
          %v1090 = vrot.slane %v1089, 1
          %v1091 = vadd.f32 %v1089, %v1090
          %v1092 = vsel %vm590, %v1052, 0.0
          %v1093 = vsel %vm590, %v1053, 0.0
          %v1094 = vadd.f32 %v1092, %v1093
          %v1095 = vsel %vm594, %v1054, 0.0
          %v1096 = vadd.f32 %v1094, %v1095
          %v1097 = vrot.slane %v1096, 4
          %v1098 = vadd.f32 %v1096, %v1097
          %v1099 = vrot.slane %v1098, 2
          %v1100 = vadd.f32 %v1098, %v1099
          %v1101 = vrot.slane %v1100, 1
          %v1102 = vadd.f32 %v1100, %v1101
          %v1103 = vsel %vm590, %v1055, 0.0
          %v1104 = vsel %vm590, %v1056, 0.0
          %v1105 = vadd.f32 %v1103, %v1104
          %v1106 = vsel %vm594, %v1057, 0.0
          %v1107 = vadd.f32 %v1105, %v1106
          %v1108 = vrot.slane %v1107, 4
          %v1109 = vadd.f32 %v1107, %v1108
          %v1110 = vrot.slane %v1109, 2
          %v1111 = vadd.f32 %v1109, %v1110
          %v1112 = vrot.slane %v1111, 1
          %v1113 = vadd.f32 %v1111, %v1112
          %v1114 = vsel %vm590, %v1058, 0.0
          %v1115 = vsel %vm590, %v1059, 0.0
          %v1116 = vadd.f32 %v1114, %v1115
          %v1117 = vsel %vm594, %v1060, 0.0
          %v1118 = vadd.f32 %v1116, %v1117
          %v1119 = vrot.slane %v1118, 4
          %v1120 = vadd.f32 %v1118, %v1119
          %v1121 = vrot.slane %v1120, 2
          %v1122 = vadd.f32 %v1120, %v1121
          %v1123 = vrot.slane %v1122, 1
          %v1124 = vadd.f32 %v1122, %v1123
          %v1125 = vsel %vm590, %v1061, 0.0
          %v1126 = vsel %vm590, %v1062, 0.0
          %v1127 = vadd.f32 %v1125, %v1126
          %v1128 = vsel %vm594, %v1063, 0.0
          %v1129 = vadd.f32 %v1127, %v1128
          %v1130 = vrot.slane %v1129, 4
          %v1131 = vadd.f32 %v1129, %v1130
          %v1132 = vrot.slane %v1131, 2
          %v1133 = vadd.f32 %v1131, %v1132
          %v1134 = vrot.slane %v1133, 1
          %v1135 = vadd.f32 %v1133, %v1134
          %v1136 = vsel %vm590, %v1064, 0.0
          %v1137 = vsel %vm590, %v1065, 0.0
          %v1138 = vadd.f32 %v1136, %v1137
          %v1139 = vsel %vm594, %v1066, 0.0
          %v1140 = vadd.f32 %v1138, %v1139
          %v1141 = vrot.slane %v1140, 4
          %v1142 = vadd.f32 %v1140, %v1141
          %v1143 = vrot.slane %v1142, 2
          %v1144 = vadd.f32 %v1142, %v1143
          %v1145 = vrot.slane %v1144, 1
          %v1146 = vadd.f32 %v1144, %v1145
          %v1147 = vsel %vm590, %v1067, 0.0
          %v1148 = vsel %vm590, %v1068, 0.0
          %v1149 = vadd.f32 %v1147, %v1148
          %v1150 = vsel %vm594, %v1069, 0.0
          %v1151 = vadd.f32 %v1149, %v1150
          %v1152 = vrot.slane %v1151, 4
          %v1153 = vadd.f32 %v1151, %v1152
          %v1154 = vrot.slane %v1153, 2
          %v1155 = vadd.f32 %v1153, %v1154
          %v1156 = vrot.slane %v1155, 1
          %v1157 = vadd.f32 %v1155, %v1156
          %v1159 = vrot.slane %v589, 1
          %v1160 = vrot.slane %v589, 2
          %v1161 = vrot.slane %v589, 3
          %v1162 = vrot.slane %v589, 4
          %v1163 = vrot.slane %v589, 5
          %v1164 = vrot.slane %v589, 6
          %v1165 = vrot.slane %v589, 7
          %v1174 = vmul.f32 %v1080, %v589
          %v1175 = vmul.f32 %v1091, %v1159
          %v1176 = vmul.f32 %v1102, %v1160
          %v1177 = vmul.f32 %v1113, %v1161
          %v1178 = vmul.f32 %v1124, %v1162
          %v1179 = vmul.f32 %v1135, %v1163
          %v1180 = vmul.f32 %v1146, %v1164
          %v1181 = vmul.f32 %v1157, %v1165
          %v1182 = vsel %vm1007, %v705, 0.0
          %v1183 = vsel %vm1008, %v707, 0.0
          %v1184 = vsel %vm1009, %v709, 0.0
          %v1185 = vsel %vm1010, %v711, 0.0
          %v1186 = vsel %vm1011, %v713, 0.0
          %v1187 = vsel %vm1012, %v715, 0.0
          %v1188 = vsel %vm1013, %v717, 0.0
          %v1189 = vsel %vm1014, %v719, 0.0
          %v1190 = vsel %vm1015, %v721, 0.0
          %v1191 = vsel %vm1016, %v723, 0.0
          %v1192 = vsel %vm1017, %v725, 0.0
          %v1193 = vsel %vm1018, %v727, 0.0
          %v1194 = vsel %vm1019, %v729, 0.0
          %v1195 = vsel %vm1020, %v731, 0.0
          %v1196 = vsel %vm1021, %v733, 0.0
          %v1197 = vsel %vm1022, %v735, 0.0
          %v1198 = vsel %vm1023, %v737, 0.0
          %v1199 = vsel %vm1024, %v739, 0.0
          %v1200 = vsel %vm1025, %v741, 0.0
          %v1201 = vsel %vm1026, %v743, 0.0
          %v1202 = vsel %vm1027, %v745, 0.0
          %v1203 = vsel %vm1028, %v747, 0.0
          %v1204 = vsel %vm1029, %v749, 0.0
          %v1205 = vsel %vm1030, %v751, 0.0
          %v1206 = vsel %vm590, %v1182, 0.0
          %v1207 = vsel %vm590, %v1183, 0.0
          %v1208 = vadd.f32 %v1206, %v1207
          %v1209 = vsel %vm594, %v1184, 0.0
          %v1210 = vadd.f32 %v1208, %v1209
          %v1211 = vrot.slane %v1210, 4
          %v1212 = vadd.f32 %v1210, %v1211
          %v1213 = vrot.slane %v1212, 2
          %v1214 = vadd.f32 %v1212, %v1213
          %v1215 = vrot.slane %v1214, 1
          %v1216 = vadd.f32 %v1214, %v1215
          %v1217 = vsel %vm590, %v1185, 0.0
          %v1218 = vsel %vm590, %v1186, 0.0
          %v1219 = vadd.f32 %v1217, %v1218
          %v1220 = vsel %vm594, %v1187, 0.0
          %v1221 = vadd.f32 %v1219, %v1220
          %v1222 = vrot.slane %v1221, 4
          %v1223 = vadd.f32 %v1221, %v1222
          %v1224 = vrot.slane %v1223, 2
          %v1225 = vadd.f32 %v1223, %v1224
          %v1226 = vrot.slane %v1225, 1
          %v1227 = vadd.f32 %v1225, %v1226
          %v1228 = vsel %vm590, %v1188, 0.0
          %v1229 = vsel %vm590, %v1189, 0.0
          %v1230 = vadd.f32 %v1228, %v1229
          %v1231 = vsel %vm594, %v1190, 0.0
          %v1232 = vadd.f32 %v1230, %v1231
          %v1233 = vrot.slane %v1232, 4
          %v1234 = vadd.f32 %v1232, %v1233
          %v1235 = vrot.slane %v1234, 2
          %v1236 = vadd.f32 %v1234, %v1235
          %v1237 = vrot.slane %v1236, 1
          %v1238 = vadd.f32 %v1236, %v1237
          %v1239 = vsel %vm590, %v1191, 0.0
          %v1240 = vsel %vm590, %v1192, 0.0
          %v1241 = vadd.f32 %v1239, %v1240
          %v1242 = vsel %vm594, %v1193, 0.0
          %v1243 = vadd.f32 %v1241, %v1242
          %v1244 = vrot.slane %v1243, 4
          %v1245 = vadd.f32 %v1243, %v1244
          %v1246 = vrot.slane %v1245, 2
          %v1247 = vadd.f32 %v1245, %v1246
          %v1248 = vrot.slane %v1247, 1
          %v1249 = vadd.f32 %v1247, %v1248
          %v1250 = vsel %vm590, %v1194, 0.0
          %v1251 = vsel %vm590, %v1195, 0.0
          %v1252 = vadd.f32 %v1250, %v1251
          %v1253 = vsel %vm594, %v1196, 0.0
          %v1254 = vadd.f32 %v1252, %v1253
          %v1255 = vrot.slane %v1254, 4
          %v1256 = vadd.f32 %v1254, %v1255
          %v1257 = vrot.slane %v1256, 2
          %v1258 = vadd.f32 %v1256, %v1257
          %v1259 = vrot.slane %v1258, 1
          %v1260 = vadd.f32 %v1258, %v1259
          %v1261 = vsel %vm590, %v1197, 0.0
          %v1262 = vsel %vm590, %v1198, 0.0
          %v1263 = vadd.f32 %v1261, %v1262
          %v1264 = vsel %vm594, %v1199, 0.0
          %v1265 = vadd.f32 %v1263, %v1264
          %v1266 = vrot.slane %v1265, 4
          %v1267 = vadd.f32 %v1265, %v1266
          %v1268 = vrot.slane %v1267, 2
          %v1269 = vadd.f32 %v1267, %v1268
          %v1270 = vrot.slane %v1269, 1
          %v1271 = vadd.f32 %v1269, %v1270
          %v1272 = vsel %vm590, %v1200, 0.0
          %v1273 = vsel %vm590, %v1201, 0.0
          %v1274 = vadd.f32 %v1272, %v1273
          %v1275 = vsel %vm594, %v1202, 0.0
          %v1276 = vadd.f32 %v1274, %v1275
          %v1277 = vrot.slane %v1276, 4
          %v1278 = vadd.f32 %v1276, %v1277
          %v1279 = vrot.slane %v1278, 2
          %v1280 = vadd.f32 %v1278, %v1279
          %v1281 = vrot.slane %v1280, 1
          %v1282 = vadd.f32 %v1280, %v1281
          %v1283 = vsel %vm590, %v1203, 0.0
          %v1284 = vsel %vm590, %v1204, 0.0
          %v1285 = vadd.f32 %v1283, %v1284
          %v1286 = vsel %vm594, %v1205, 0.0
          %v1287 = vadd.f32 %v1285, %v1286
          %v1288 = vrot.slane %v1287, 4
          %v1289 = vadd.f32 %v1287, %v1288
          %v1290 = vrot.slane %v1289, 2
          %v1291 = vadd.f32 %v1289, %v1290
          %v1292 = vrot.slane %v1291, 1
          %v1293 = vadd.f32 %v1291, %v1292
          %vm1294 = vcmp.ge.f32.partialorder %v1216, 1.0
          %vm1295 = vcmp.ge.f32.partialorder %v1227, 1.0
          %vm1296 = vcmp.ge.f32.partialorder %v1238, 1.0
          %vm1297 = vcmp.ge.f32.partialorder %v1249, 1.0
          %vm1298 = vcmp.ge.f32.partialorder %v1260, 1.0
          %vm1299 = vcmp.ge.f32.partialorder %v1271, 1.0
          %vm1300 = vcmp.ge.f32.partialorder %v1282, 1.0
          %vm1301 = vcmp.ge.f32.partialorder %v1293, 1.0
          %v1302 = vsel %vm1294, 1, 0
          %v1303 = vsel %vm1295, 1, 0
          %v1304 = vsel %vm1296, 1, 0
          %v1305 = vsel %vm1297, 1, 0
          %v1306 = vsel %vm1298, 1, 0
          %v1307 = vsel %vm1299, 1, 0
          %v1308 = vsel %vm1300, 1, 0
          %v1309 = vsel %vm1301, 1, 0
          %v1310 = vcvt.s32.f32 %v1302
          %v1311 = vcvt.s32.f32 %v1303
          %v1312 = vcvt.s32.f32 %v1304
          %v1313 = vcvt.s32.f32 %v1305
          %v1314 = vcvt.s32.f32 %v1306
          %v1315 = vcvt.s32.f32 %v1307
          %v1316 = vcvt.s32.f32 %v1308
          %v1317 = vcvt.s32.f32 %v1309
          %v1318 = vmul.f32 %v1216, %v840
          %v1319 = vmul.f32 %v1227, %v841
          %v1320 = vmul.f32 %v1238, %v842
          %v1321 = vmul.f32 %v1249, %v843
          %v1322 = vmul.f32 %v1260, %v844
          %v1323 = vmul.f32 %v1271, %v845
          %v1324 = vmul.f32 %v1282, %v846
          %v1325 = vmul.f32 %v1293, %v847
          %v1326 = vsub.f32 0.0, %v1174
          %v1327 = vsub.f32 0.0, %v1175
          %v1328 = vsub.f32 0.0, %v1176
          %v1329 = vsub.f32 0.0, %v1177
          %v1330 = vsub.f32 0.0, %v1178
          %v1331 = vsub.f32 0.0, %v1179
          %v1332 = vsub.f32 0.0, %v1180
          %v1333 = vsub.f32 0.0, %v1181
          %v1334 = vadd.f32 %v1318, 1e-07
          %v1335 = vadd.f32 %v1319, 1e-07
          %v1336 = vadd.f32 %v1320, 1e-07
          %v1337 = vadd.f32 %v1321, 1e-07
          %v1338 = vadd.f32 %v1322, 1e-07
          %v1339 = vadd.f32 %v1323, 1e-07
          %v1340 = vadd.f32 %v1324, 1e-07
          %v1341 = vadd.f32 %v1325, 1e-07
          %v1342 = vlog2.pop %v1334
          %v1343 = vmul.f32 %v1342, 0.6931472
          %v1344 = vlog2.pop %v1335
          %v1345 = vmul.f32 %v1344, 0.6931472
          %v1346 = vlog2.pop %v1336
          %v1347 = vmul.f32 %v1346, 0.6931472
          %v1348 = vlog2.pop %v1337
          %v1349 = vmul.f32 %v1348, 0.6931472
          %v1350 = vlog2.pop %v1338
          %v1351 = vmul.f32 %v1350, 0.6931472
          %v1352 = vlog2.pop %v1339
          %v1353 = vmul.f32 %v1352, 0.6931472
          %v1354 = vlog2.pop %v1340
          %v1355 = vmul.f32 %v1354, 0.6931472
          %v1356 = vlog2.pop %v1341
          %v1357 = vmul.f32 %v1356, 0.6931472
          %v1358 = vmul.f32 %v1326, %v1343
          %v1359 = vmul.f32 %v1327, %v1345
          %v1360 = vmul.f32 %v1328, %v1347
          %v1361 = vmul.f32 %v1329, %v1349
          %v1362 = vmul.f32 %v1330, %v1351
          %v1363 = vmul.f32 %v1331, %v1353
          %v1364 = vmul.f32 %v1332, %v1355
          %v1365 = vmul.f32 %v1333, %v1357
          %v1366 = vld [vmem:[#allocation3] sm:$0x1]
          %v1367 = vmul.f32 %v1310, %v1174
          %v1368 = vmul.f32 %v1311, %v1175
          %v1369 = vmul.f32 %v1312, %v1176
          %v1370 = vmul.f32 %v1313, %v1177
          %v1371 = vmul.f32 %v1314, %v1178
          %v1372 = vmul.f32 %v1315, %v1179
          %v1373 = vmul.f32 %v1316, %v1180
          %v1374 = vmul.f32 %v1317, %v1181
          %v1383 = vrot.slane %v1368, 7
          %vm1384 = vcmask 1041409
          %v1385 = vsel %vm1384, %v1383, %v1367
          %v1386 = vrot.slane %v1369, 6
          %vm1387 = vcmask 1042434
          %v1388 = vsel %vm1387, %v1386, %v1385
          %v1389 = vrot.slane %v1370, 5
          %vm1390 = vcmask 1043459
          %v1391 = vsel %vm1390, %v1389, %v1388
          %v1392 = vrot.slane %v1371, 4
          %vm1393 = vcmask 1044484
          %v1394 = vsel %vm1393, %v1392, %v1391
          %v1395 = vrot.slane %v1372, 3
          %vm1396 = vcmask 1045509
          %v1397 = vsel %vm1396, %v1395, %v1394
          %v1398 = vrot.slane %v1373, 2
          %vm1399 = vcmask 1046534
          %v1400 = vsel %vm1399, %v1398, %v1397
          %v1401 = vrot.slane %v1374, 1
          %vm1402 = vcmask 1047559
          %v1403 = vsel %vm1402, %v1401, %v1400
          %v1405 = vsel %vm590, %v1403, 0.0
          %1406 = vadd.xlane.f32.xlu0 %v1405
          %v1407 = vpop.xlane.xlu0 %1406
          %v1408 = vrot.slane %v1407, 4
          %v1409 = vadd.f32 %v1407, %v1408
          %v1410 = vrot.slane %v1409, 2
          %v1411 = vadd.f32 %v1409, %v1410
          %v1412 = vrot.slane %v1411, 1
          %v1413 = vadd.f32 %v1411, %v1412
          %s1414 = vtos %v1413
          %v1415 = vstv %s1414
          %v1416 = vadd.f32 %v1366, %v1415
          %vm1417 = vcmask 0
          %1418 = vst.msk [vmem:[#allocation3] sm:$0x1] %vm1417, %v1416
          %v1419 = vld [vmem:[#allocation4] sm:$0x1]
          %v1428 = vrot.slane %v1175, 7
          %v1429 = vsel %vm1384, %v1428, %v1174
          %v1430 = vrot.slane %v1176, 6
          %v1431 = vsel %vm1387, %v1430, %v1429
          %v1432 = vrot.slane %v1177, 5
          %v1433 = vsel %vm1390, %v1432, %v1431
          %v1434 = vrot.slane %v1178, 4
          %v1435 = vsel %vm1393, %v1434, %v1433
          %v1436 = vrot.slane %v1179, 3
          %v1437 = vsel %vm1396, %v1436, %v1435
          %v1438 = vrot.slane %v1180, 2
          %v1439 = vsel %vm1399, %v1438, %v1437
          %v1440 = vrot.slane %v1181, 1
          %v1441 = vsel %vm1402, %v1440, %v1439
          %v1443 = vsel %vm590, %v1441, 0.0
          %1444 = vadd.xlane.f32.xlu0 %v1443
          %v1445 = vpop.xlane.xlu0 %1444
          %v1446 = vrot.slane %v1445, 4
          %v1447 = vadd.f32 %v1445, %v1446
          %v1448 = vrot.slane %v1447, 2
          %v1449 = vadd.f32 %v1447, %v1448
          %v1450 = vrot.slane %v1449, 1
          %v1451 = vadd.f32 %v1449, %v1450
          %s1452 = vtos %v1451
          %v1453 = vstv %s1452
          %v1454 = vadd.f32 %v1419, %v1453
          %1455 = vst.msk [vmem:[#allocation4] sm:$0x1] %vm1417, %v1454
          %v1456 = vld [vmem:[#allocation5] sm:$0x1]
          %v1457 = vmul.f32 %v1358, %v1174
          %v1458 = vmul.f32 %v1359, %v1175
          %v1459 = vmul.f32 %v1360, %v1176
          %v1460 = vmul.f32 %v1361, %v1177
          %v1461 = vmul.f32 %v1362, %v1178
          %v1462 = vmul.f32 %v1363, %v1179
          %v1463 = vmul.f32 %v1364, %v1180
          %v1464 = vmul.f32 %v1365, %v1181
          %v1473 = vrot.slane %v1458, 7
          %v1474 = vsel %vm1384, %v1473, %v1457
          %v1475 = vrot.slane %v1459, 6
          %v1476 = vsel %vm1387, %v1475, %v1474
          %v1477 = vrot.slane %v1460, 5
          %v1478 = vsel %vm1390, %v1477, %v1476
          %v1479 = vrot.slane %v1461, 4
          %v1480 = vsel %vm1393, %v1479, %v1478
          %v1481 = vrot.slane %v1462, 3
          %v1482 = vsel %vm1396, %v1481, %v1480
          %v1483 = vrot.slane %v1463, 2
          %v1484 = vsel %vm1399, %v1483, %v1482
          %v1485 = vrot.slane %v1464, 1
          %v1486 = vsel %vm1402, %v1485, %v1484
          %v1488 = vsel %vm590, %v1486, 0.0
          %1489 = vadd.xlane.f32.xlu0 %v1488
          %v1490 = vpop.xlane.xlu0 %1489
          %v1491 = vrot.slane %v1490, 4
          %v1492 = vadd.f32 %v1490, %v1491
          %v1493 = vrot.slane %v1492, 2
          %v1494 = vadd.f32 %v1492, %v1493
          %v1495 = vrot.slane %v1494, 1
          %v1496 = vadd.f32 %v1494, %v1495
          %s1497 = vtos %v1496
          %v1498 = vstv %s1497
          %v1499 = vadd.f32 %v1456, %v1498
          %1500 = vst.msk [vmem:[#allocation5] sm:$0x1] %vm1417, %v1499
        $region57: #{tpu_custom_call.1} parent=47 // loop_footer
          %s533 = sadd.s32 1, %s529
        $region58: #{tpu_custom_call.1} parent=47 // loop_footer_branch
          %528 = sbr.rel target = $region54
        $region59: #{tpu_custom_call.1} parent=47 // loop_exit
          _
        %p1501 = scmp.eq.s32.totalorder %s28, 1
        // Predicated region
        $region60: #{tpu_custom_call.1} parent=47 // pred_check
          %p1502 = pneg %p1501
        $region61: #{tpu_custom_call.1} parent=47 // pred_check_branch
          %1504 = sbr.rel (%p1502) target = $region63
        $region62: #{tpu_custom_call.1} parent=47 // pred_region
          %v1505 = vld [vmem:[%s493] sm:$0xff]
          %v1506 = vld [vmem:[%s493 + $0x8] sm:$0xff]
          %v1507 = vld [vmem:[%s493 + $0x10] sm:$0x3f]
          %v1508 = vld [vmem:[%s499] sm:$0x1]
          %1510 = vset.pattern.permute.xlu0 0
          %1511 = vperm.xlu0 %1510, %v521
          %v1512 = vpop.permute.xlu0 %1511
          %1515 = vset.pattern.permute.xlu0 0
          %1516 = vperm.xlu0 %1515, %v522
          %v1517 = vpop.permute.xlu0 %1516
          %1520 = vset.pattern.permute.xlu0 0
          %1521 = vperm.xlu0 %1520, %v523
          %v1522 = vpop.permute.xlu0 %1521
          %v1524 = vmul.f32 %v1505, %v1512
          %v1525 = vmul.f32 %v1506, %v1517
          %v1526 = vmul.f32 %v1507, %v1522
          %v1527 = vld [vmem:[#allocation2] sm:$0xff]
          %v1528 = vld [vmem:[#allocation2 + $0x8] sm:$0xff]
          %v1529 = vld [vmem:[#allocation2 + $0x10] sm:$0x3f]
          %vm1530 = vcmask 195584
          %v1531 = vsel %vm1530, %v1527, 0.0
          %v1532 = vsel %vm1530, %v1528, 0.0
          %v1533 = vadd.f32 %v1531, %v1532
          %vm1534 = vcmask 193536
          %v1535 = vsel %vm1534, %v1529, 0.0
          %v1536 = vadd.f32 %v1533, %v1535
          %v1537 = vrot.slane %v1536, 4
          %v1538 = vadd.f32 %v1536, %v1537
          %v1539 = vrot.slane %v1538, 2
          %v1540 = vadd.f32 %v1538, %v1539
          %v1541 = vrot.slane %v1540, 1
          %v1542 = vadd.f32 %v1540, %v1541
          %v1543 = vadd.f32 %v1542, 1e-06
          %v1544 = vrcp.pop %v1543
          %v1545 = vmul.f32 %v1527, %v1544
          %v1546 = vmul.f32 %v1528, %v1544
          %v1547 = vmul.f32 %v1529, %v1544
          %v1548 = vmul.f32 %v1545, %v1512
          %v1549 = vmul.f32 %v1546, %v1517
          %v1550 = vmul.f32 %v1547, %v1522
          %v1551 = vmul.f32 %v1548, %v1524
          %v1552 = vmul.f32 %v1549, %v1525
          %v1553 = vmul.f32 %v1550, %v1526
          %v1554 = vsel %vm1530, %v1551, 0.0
          %v1555 = vsel %vm1530, %v1552, 0.0
          %v1556 = vadd.f32 %v1554, %v1555
          %v1557 = vsel %vm1534, %v1553, 0.0
          %v1558 = vadd.f32 %v1556, %v1557
          %v1559 = vrot.slane %v1558, 4
          %v1560 = vadd.f32 %v1558, %v1559
          %v1561 = vrot.slane %v1560, 2
          %v1562 = vadd.f32 %v1560, %v1561
          %v1563 = vrot.slane %v1562, 1
          %v1564 = vadd.f32 %v1562, %v1563
          %v1565 = vmul.f32 %v1548, %v1548
          %v1566 = vmul.f32 %v1549, %v1549
          %v1567 = vmul.f32 %v1550, %v1550
          %v1568 = vsel %vm1530, %v1565, 0.0
          %v1569 = vsel %vm1530, %v1566, 0.0
          %v1570 = vadd.f32 %v1568, %v1569
          %v1571 = vsel %vm1534, %v1567, 0.0
          %v1572 = vadd.f32 %v1570, %v1571
          %v1573 = vrot.slane %v1572, 4
          %v1574 = vadd.f32 %v1572, %v1573
          %v1575 = vrot.slane %v1574, 2
          %v1576 = vadd.f32 %v1574, %v1575
          %v1577 = vrot.slane %v1576, 1
          %v1578 = vadd.f32 %v1576, %v1577
          %v1579 = vrsqrt.pop %v1578
          %v1580 = vmul.f32 %v1578, %v1579
          %vm1581 = vcmp.eq.f32.partialorder %v1578, inf
          %v1582 = vsel %vm1581, %v1578, %v1580
          %vm1583 = vcmp.eq.f32.partialorder %v1578, 0.0
          %v1584 = vand.u32 %v1578, 2147483648
          %v1585 = vsel %vm1583, %v1584, %v1582
          %v1586 = vmul.f32 %v1524, %v1524
          %v1587 = vmul.f32 %v1525, %v1525
          %v1588 = vmul.f32 %v1526, %v1526
          %v1589 = vsel %vm1530, %v1586, 0.0
          %v1590 = vsel %vm1530, %v1587, 0.0
          %v1591 = vadd.f32 %v1589, %v1590
          %v1592 = vsel %vm1534, %v1588, 0.0
          %v1593 = vadd.f32 %v1591, %v1592
          %v1594 = vrot.slane %v1593, 4
          %v1595 = vadd.f32 %v1593, %v1594
          %v1596 = vrot.slane %v1595, 2
          %v1597 = vadd.f32 %v1595, %v1596
          %v1598 = vrot.slane %v1597, 1
          %v1599 = vadd.f32 %v1597, %v1598
          %v1600 = vrsqrt.pop %v1599
          %v1601 = vmul.f32 %v1599, %v1600
          %vm1602 = vcmp.eq.f32.partialorder %v1599, inf
          %v1603 = vsel %vm1602, %v1599, %v1601
          %vm1604 = vcmp.eq.f32.partialorder %v1599, 0.0
          %v1605 = vand.u32 %v1599, 2147483648
          %v1606 = vsel %vm1604, %v1605, %v1603
          %v1607 = vmax.f32 %v1585, 1e-08
          %v1608 = vmax.f32 %v1606, 1e-08
          %v1609 = vmul.f32 %v1607, %v1608
          %v1610 = vrcp.pop %v1609
          %v1611 = vmul.f32 %v1564, %v1610
          %v1612 = vld [vmem:[%s507] sm:$0xff]
          %v1613 = vld [vmem:[%s507 + $0x8] sm:$0xff]
          %v1614 = vld [vmem:[%s507 + $0x10] sm:$0x3f]
          %v1615 = vsel %vm1530, %v1612, -inf
          %v1616 = vsel %vm1530, %v1613, -inf
          %v1617 = vsel %vm1534, %v1614, -inf
          %v1618 = vmax.f32 %v1615, %v1616
          %v1619 = vmax.f32 %v1618, %v1617
          %v1620 = vrot.slane %v1619, 4
          %v1621 = vmax.f32 %v1619, %v1620
          %v1622 = vrot.slane %v1621, 2
          %v1623 = vmax.f32 %v1621, %v1622
          %v1624 = vrot.slane %v1623, 1
          %v1625 = vmax.f32 %v1623, %v1624
          %v1626 = vsub.f32 %v1612, %v1625
          %v1627 = vsub.f32 %v1613, %v1625
          %v1628 = vsub.f32 %v1614, %v1625
          %v1629 = vmul.f32 %v1626, 1.442695
          %v1630 = vpow.pop %v1629
          %v1631 = vmul.f32 %v1627, 1.442695
          %v1632 = vpow.pop %v1631
          %v1633 = vmul.f32 %v1628, 1.442695
          %v1634 = vpow.pop %v1633
          %v1635 = vsel %vm1530, %v1630, 0.0
          %v1636 = vsel %vm1530, %v1632, 0.0
          %v1637 = vadd.f32 %v1635, %v1636
          %v1638 = vsel %vm1534, %v1634, 0.0
          %v1639 = vadd.f32 %v1637, %v1638
          %v1640 = vrot.slane %v1639, 4
          %v1641 = vadd.f32 %v1639, %v1640
          %v1642 = vrot.slane %v1641, 2
          %v1643 = vadd.f32 %v1641, %v1642
          %v1644 = vrot.slane %v1643, 1
          %v1645 = vadd.f32 %v1643, %v1644
          %v1646 = vrcp.pop %v1645
          %v1647 = vmul.f32 %v1630, %v1646
          %v1648 = vmul.f32 %v1632, %v1646
          %v1649 = vmul.f32 %v1634, %v1646
          %v1650 = vmul.f32 %v1647, %v1512
          %v1651 = vmul.f32 %v1648, %v1517
          %v1652 = vmul.f32 %v1649, %v1522
          %v1653 = vmul.f32 %v1650, %v1524
          %v1654 = vmul.f32 %v1651, %v1525
          %v1655 = vmul.f32 %v1652, %v1526
          %v1656 = vsel %vm1530, %v1653, 0.0
          %v1657 = vsel %vm1530, %v1654, 0.0
          %v1658 = vadd.f32 %v1656, %v1657
          %v1659 = vsel %vm1534, %v1655, 0.0
          %v1660 = vadd.f32 %v1658, %v1659
          %v1661 = vrot.slane %v1660, 4
          %v1662 = vadd.f32 %v1660, %v1661
          %v1663 = vrot.slane %v1662, 2
          %v1664 = vadd.f32 %v1662, %v1663
          %v1665 = vrot.slane %v1664, 1
          %v1666 = vadd.f32 %v1664, %v1665
          %v1667 = vmul.f32 %v1650, %v1650
          %v1668 = vmul.f32 %v1651, %v1651
          %v1669 = vmul.f32 %v1652, %v1652
          %v1670 = vsel %vm1530, %v1667, 0.0
          %v1671 = vsel %vm1530, %v1668, 0.0
          %v1672 = vadd.f32 %v1670, %v1671
          %v1673 = vsel %vm1534, %v1669, 0.0
          %v1674 = vadd.f32 %v1672, %v1673
          %v1675 = vrot.slane %v1674, 4
          %v1676 = vadd.f32 %v1674, %v1675
          %v1677 = vrot.slane %v1676, 2
          %v1678 = vadd.f32 %v1676, %v1677
          %v1679 = vrot.slane %v1678, 1
          %v1680 = vadd.f32 %v1678, %v1679
          %v1681 = vrsqrt.pop %v1680
          %v1682 = vmul.f32 %v1680, %v1681
          %vm1683 = vcmp.eq.f32.partialorder %v1680, inf
          %v1684 = vsel %vm1683, %v1680, %v1682
          %vm1685 = vcmp.eq.f32.partialorder %v1680, 0.0
          %v1686 = vand.u32 %v1680, 2147483648
          %v1687 = vsel %vm1685, %v1686, %v1684
          %v1688 = vmax.f32 %v1687, 1e-08
          %v1689 = vmul.f32 %v1688, %v1608
          %v1690 = vrcp.pop %v1689
          %v1691 = vmul.f32 %v1666, %v1690
          %v1692 = vmul.f32 %v1691, %v1508
          %vm1693 = vcmask 188416
          %v1694 = vsel %vm1693, %v1692, 0.0
          %1695 = vadd.xlane.f32.xlu0 %v1694
          %v1696 = vpop.xlane.xlu0 %1695
          %v1697 = vrot.slane %v1696, 4
          %v1698 = vadd.f32 %v1696, %v1697
          %v1699 = vrot.slane %v1698, 2
          %v1700 = vadd.f32 %v1698, %v1699
          %v1701 = vrot.slane %v1700, 1
          %v1702 = vadd.f32 %v1700, %v1701
          %s1703 = vtos %v1702
          %v1704 = vstv %s1703
          %v1705 = vmul.f32 %v1611, %v1508
          %v1706 = vsel %vm1693, %v1705, 0.0
          %1707 = vadd.xlane.f32.xlu0 %v1706
          %v1708 = vpop.xlane.xlu0 %1707
          %v1709 = vrot.slane %v1708, 4
          %v1710 = vadd.f32 %v1708, %v1709
          %v1711 = vrot.slane %v1710, 2
          %v1712 = vadd.f32 %v1710, %v1711
          %v1713 = vrot.slane %v1712, 1
          %v1714 = vadd.f32 %v1712, %v1713
          %s1715 = vtos %v1714
          %v1716 = vstv %s1715
          %v1717 = vsel %vm1693, %v1508, 0.0
          %1718 = vadd.xlane.f32.xlu0 %v1717
          %v1719 = vpop.xlane.xlu0 %1718
          %v1720 = vrot.slane %v1719, 4
          %v1721 = vadd.f32 %v1719, %v1720
          %v1722 = vrot.slane %v1721, 2
          %v1723 = vadd.f32 %v1721, %v1722
          %v1724 = vrot.slane %v1723, 1
          %v1725 = vadd.f32 %v1723, %v1724
          %s1726 = vtos %v1725
          %v1727 = vstv %s1726
          %v1728 = vld [vmem:[#allocation3] sm:$0x1]
          %v1729 = vld [vmem:[#allocation4] sm:$0x1]
          %v1730 = vld [vmem:[#allocation5] sm:$0x1]
          %v1732 = vlaneseq
          %v1733 = vshrl.u32 %v1732, 7
          %v1734 = vsub.s32 0, %v1733
          %v1735 = vrot.slane %v1728, %v1734
          %1736 = vrot.lane.b32.xlu0 %v1735, 3
          %v1737 = vpop.permute.xlu0 %1736
          %v1740 = vlaneseq
          %v1741 = vshrl.u32 %v1740, 7
          %v1742 = vsub.s32 0, %v1741
          %v1743 = vrot.slane %v1729, %v1742
          %1744 = vrot.lane.b32.xlu0 %v1743, 4
          %v1745 = vpop.permute.xlu0 %1744
          %v1748 = vlaneseq
          %v1749 = vshrl.u32 %v1748, 7
          %v1750 = vsub.s32 0, %v1749
          %v1751 = vrot.slane %v1730, %v1750
          %1752 = vrot.lane.b32.xlu0 %v1751, 5
          %v1753 = vpop.permute.xlu0 %1752
          %vm1755 = vcmask 7168
          %v1756 = vsel %vm1755, %v1704, %v1716
          %vm1757 = vcmask 15360
          %v1758 = vsel %vm1757, %v1756, %v1727
          %vm1759 = vcmask 23552
          %v1760 = vsel %vm1759, %v1758, %v1737
          %vm1761 = vcmask 31744
          %v1762 = vsel %vm1761, %v1760, %v1745
          %vm1763 = vcmask 39936
          %v1764 = vsel %vm1763, %v1762, %v1753
          %vm1765 = vcmask 48128
          %v1766 = vsel %vm1765, %v1764, 0.0
          %vm1767 = vcmask 57344
          %1768 = vst.msk [vmem:[%s445] sm:$0x1] %vm1767, %v1766
        $region63: #{tpu_custom_call.1} parent=47 // pred_fallthru
          _
        %s1769 = sand.u32 %s245, 1
        %s1770 = scalar_lea.sflag [#allocation7], %s1769
        %s1771 = sand.u32 %s245, 1
        %s1772 = scalar_lea.vmem [#allocation6], %s1771
        // Predicated region
        $region64: #{tpu_custom_call.1} parent=47 // pred_check
          %p1773 = pneg %p255
        $region65: #{tpu_custom_call.1} parent=47 // pred_check_branch
          %1775 = sbr.rel (%p1773) target = $region67
        $region66: #{tpu_custom_call.1} parent=47 // pred_region
          %s1777 = ssub.s32 16, 16
          %1778 = vsyncadd %s1770, %s1777
          %s1779 = sadd.s32 %s27, %s26
          %s1780 = smul.addr %s1779, 16
          %s1781 = scalar_lea.hbm %s7, %s1780
          %s1783 = sshll.u32 %s1772, 4
          %s1784 = int_to_ptr.vmem [resolvable:$true] %s1783
          %1786 = dma.vmem_to_hbm [thread:$0]  %s1784, 16, %s1781, %s1770
        $region67: #{tpu_custom_call.1} parent=47 // pred_fallthru
          _
      $region48: #{tpu_custom_call.1} parent=5 // pred_fallthru
        _
      %p1787 = scmp.le.s32.totalorder 2, %s16
      // Predicated region
      $region68: #{tpu_custom_call.1} parent=5 // pred_check
        %p1788 = pneg %p1787
      $region69: #{tpu_custom_call.1} parent=5 // pred_check_branch
        %1790 = sbr.rel (%p1788) target = $region71
      $region70: #{tpu_custom_call.1} parent=5 // pred_region
        %s1791 = ssub.s32 %s16, 2
        // Predicated region
        $region72: #{tpu_custom_call.1} parent=70 // pred_check
          %p1792 = pneg %p261
        $region73: #{tpu_custom_call.1} parent=70 // pred_check_branch
          %1794 = sbr.rel (%p1792) target = $region75
        $region74: #{tpu_custom_call.1} parent=70 // pred_region
          %s1795 = sand.u32 %s246, 1
          %s1796 = scalar_lea.sflag [#allocation7], %s1795
          %s1797 = sand.u32 %s246, 1
          %s1798 = scalar_lea.vmem [#allocation6], %s1797
          %1799 = dma.done %s1796, 16
        $region75: #{tpu_custom_call.1} parent=70 // pred_fallthru
          _
      $region71: #{tpu_custom_call.1} parent=5 // pred_fallthru
        _
    $region6: #{tpu_custom_call.1} parent=1 // loop_footer
      %s20 = sadd.s32 1, %s16
    $region7: #{tpu_custom_call.1} parent=1 // loop_footer_branch
      %15 = sbr.rel target = $region3
    $region8: #{tpu_custom_call.1} parent=1 // loop_exit
      _
    %1800 = vsyncpa [#allocation7], 1
    %s1801 = scalar_lea.sflag [#allocation7], 1
    %1802 = vsyncpa %s1801, 1

</llo_original>
